<compile_context>
chip_gen: v7x
topology: tpu7x:2x2x1
jax: 0.10.0
libtpu: 0.0.40
codegen_flags: <defaults>
</compile_context>

<pallas_src>
import functools

import jax
import jax.numpy as jnp
from jax.experimental import pallas as pl
from jax.experimental.pallas import tpu as pltpu

BN_EPS = 1e-5
LRELU_SLOPE = 0.2
D_SLAB_LANES = 128  # lane-dense width for the scalar d output slab


def _bn_lrelu(h, gamma, beta):
    # BatchNorm1d, training mode, single-pass stats (mean = E[h], var = E[h^2]-mean^2,
    # biased).  Folded into one per-feature scale/shift so the [B, D] tile only sees
    # one mul + one add.
    mean = jnp.mean(h, axis=0, keepdims=True)
    ex2 = jnp.mean(h * h, axis=0, keepdims=True)
    var = jnp.maximum(ex2 - mean * mean, 0.0)
    scale = gamma * jax.lax.rsqrt(var + BN_EPS)        # (1, D)
    shift = beta - mean * scale                        # (1, D)
    y = h * scale + shift
    # LeakyReLU(0.2): max(y, 0.2*y) — no compare/select mask vreg.
    return jnp.maximum(y, LRELU_SLOPE * y)


def disc_kernel(x_ref, w0_ref, wmid_ref, gamma_ref, beta_ref,
                wf_ref, bf_ref, d_ref, h_ref):
    """One grid step = one independent forward pass over a (B, Z) group.

    x_ref    : (B, Z)    f32 input (group block, leading group dim squeezed)
    w0_ref   : (Z, D)    bf16 first SN linear, pre-transposed (resident)
    wmid_ref : (4, D, D) bf16 SN linears for base layers 1..3 + d_final's first (resident)
    gamma_ref: (5, D)    f32 BN affine scale (resident)
    beta_ref : (5, D)    f32 BN affine shift (resident)
    wf_ref   : (1, D)    f32 final SN linear row (dim -> 1) (resident)
    bf_ref   : (1, 1)    f32 final bias (resident)
    d_ref    : (B, 128)  lane-dense slab; d_final(h) broadcast across lanes
    h_ref    : (B, D)    h = base(x)

    Pre-BN linear biases are omitted — training-mode BN mean subtraction cancels
    them exactly, so they are dead work.
    """
    x = x_ref[...].astype(jnp.bfloat16)

    # block 0: Z -> D (bf16 MXU, f32 accumulate)
    h = jnp.dot(x, w0_ref[...], preferred_element_type=jnp.float32)
    h = _bn_lrelu(h, gamma_ref[0:1, :], beta_ref[0:1, :])

    # blocks 1..4: D -> D  (1..3 belong to `base`, 4 to `d_final`)
    for i in range(4):
        h = jnp.dot(h.astype(jnp.bfloat16), wmid_ref[i],
                    preferred_element_type=jnp.float32)
        h = _bn_lrelu(h, gamma_ref[i + 1:i + 2, :], beta_ref[i + 1:i + 2, :])
        if i == 2:
            # output of `base`
            h_ref[...] = h

    # final SN linear D -> 1: VPU mul + lane reduce (XLU slot is idle here);
    # do NOT revert to an N=1 MXU matmul.
    d = jnp.sum(h * wf_ref[...], axis=-1, keepdims=True) + bf_ref[...]   # (B, 1)
    # Lane-dense store: broadcast across 128 lanes -> one unmasked vst per step.
    d_ref[...] = jnp.broadcast_to(d, d_ref.shape)


def spectral_normalize(w, u, eps=1e-12):
    """One power iteration (num_svs=1, num_itrs=1), matching SNLinear semantics.

    w: (out, in) raw weight, u: (1, out) persistent left singular vector estimate.
    Returns w / sigma.
    """
    def _normalize(v):
        return v / (jnp.linalg.norm(v) + eps)

    v = _normalize(u @ w)          # (1, in)
    u_new = _normalize(v @ w.T)    # (1, out)
    sigma = (u_new @ w @ v.T)[0, 0]
    return w / sigma


def make_params(key, z_dim, dim):
    """Deterministic synthetic parameters (shapes per module __init__)."""
    keys = jax.random.split(key, 32)
    ki = iter(range(32))

    def linear(out_f, in_f):
        w = jax.random.normal(keys[next(ki)], (out_f, in_f), jnp.float32) * 0.05
        b = jax.random.normal(keys[next(ki)], (out_f,), jnp.float32) * 0.01
        u = jax.random.normal(keys[next(ki)], (1, out_f), jnp.float32)
        return spectral_normalize(w, u), b

    # base: Linear(Z, dim) + 3 x Linear(dim, dim)
    w0, b0 = linear(dim, z_dim)
    mids = [linear(dim, dim) for _ in range(3)]
    # d_final: Linear(dim, dim), ..., Linear(dim, 1)
    w4, b4 = linear(dim, dim)
    wf, bf = linear(1, dim)

    w_mid = jnp.stack([m[0] for m in mids] + [w4], axis=0)   # (4, dim, dim)  (out, in)
    b_mid = jnp.stack([m[1] for m in mids] + [b4], axis=0)   # (4, dim)

    # BatchNorm1d affine params (default init: gamma=1, beta=0), 5 BN layers total.
    gamma = jnp.ones((5, dim), jnp.float32)
    beta = jnp.zeros((5, dim), jnp.float32)

    return dict(
        # bf16 pre-transposed matmul weights for the kernel
        w0t=w0.T.astype(jnp.bfloat16),                                   # (Z, dim)
        w_mid_t=jnp.transpose(w_mid, (0, 2, 1)).astype(jnp.bfloat16),    # (4, dim, dim)
        # biases kept only for the f32 reference (BN cancels them in the kernel)
        b0=b0.reshape(1, dim),                                           # (1, dim)
        b_mid=b_mid,                                                     # (4, dim)
        gamma=gamma,
        beta=beta,
        wf_row=wf,                                                       # (1, dim) f32
        bf=bf.reshape(1, 1),                                             # (1, 1)
    )


@jax.jit
def discriminator_single_latent(x, params):
    """x: (G, B, Z) — G independent forward passes fused into one pallas_call
    (one grid step per group).  Returns (d, h) with d: (G, B, 1), h: (G, B, D)."""
    G, B, Z = x.shape
    D = params["gamma"].shape[1]

    in_specs = [
        pl.BlockSpec((None, B, Z), lambda g: (g, 0, 0)),       # x: per-group block
        pl.BlockSpec((Z, D), lambda g: (0, 0)),                # w0t     (resident)
        pl.BlockSpec((4, D, D), lambda g: (0, 0, 0)),          # w_mid_t (resident)
        pl.BlockSpec((5, D), lambda g: (0, 0)),                # gamma   (resident)
        pl.BlockSpec((5, D), lambda g: (0, 0)),                # beta    (resident)
        pl.BlockSpec((1, D), lambda g: (0, 0)),                # wf_row  (resident)
        pl.BlockSpec((1, 1), lambda g: (0, 0)),                # bf      (resident)
    ]
    out_specs = (
        pl.BlockSpec((None, B, D_SLAB_LANES), lambda g: (g, 0, 0)),   # d slab
        pl.BlockSpec((None, B, D), lambda g: (g, 0, 0)),              # h
    )

    in_bytes = (x.nbytes + params["w0t"].nbytes + params["w_mid_t"].nbytes
                + params["gamma"].nbytes + params["beta"].nbytes
                + params["wf_row"].nbytes + params["bf"].nbytes)
    out_bytes = G * B * (D_SLAB_LANES + D) * 4
    cost = pl.CostEstimate(
        flops=G * (2 * B * Z * D + 4 * 2 * B * D * D + 2 * B * D),
        transcendentals=G * 5 * D,                 # rsqrt per BN feature row
        bytes_accessed=in_bytes + out_bytes,
    )

    d_slab, h = pl.pallas_call(
        disc_kernel,
        grid=(G,),
        out_shape=(
            jax.ShapeDtypeStruct((G, B, D_SLAB_LANES), jnp.float32),
            jax.ShapeDtypeStruct((G, B, D), jnp.float32),
        ),
        in_specs=in_specs,
        out_specs=out_specs,
        compiler_params=pltpu.CompilerParams(
            dimension_semantics=("parallel",)),    # shard groups across TCs on v7x
        cost_estimate=cost,
    )(x, params["w0t"], params["w_mid_t"], params["gamma"], params["beta"],
      params["wf_row"], params["bf"])

    return d_slab[:, :, 0:1], h


def reference_forward(xg, params):
    """Pure-JAX reference with the original module semantics (f32 math, biases,
    two-pass BN statistics), vmapped over the group axis.  Differences vs. the
    kernel are bf16 rounding only."""
    def bn_lrelu(h, g, b):
        m = jnp.mean(h, axis=0, keepdims=True)
        v = jnp.mean((h - m) ** 2, axis=0, keepdims=True)
        y = (h - m) / jnp.sqrt(v + BN_EPS) * g + b
        return jnp.where(y > 0, y, LRELU_SLOPE * y)

    def single(x):
        h = x @ params["w0t"].astype(jnp.float32) + params["b0"]
        h = bn_lrelu(h, params["gamma"][0:1], params["beta"][0:1])
        h_out = None
        for i in range(4):
            h = (h @ params["w_mid_t"][i].astype(jnp.float32)
                 + params["b_mid"][i:i + 1])
            h = bn_lrelu(h, params["gamma"][i + 1:i + 2], params["beta"][i + 1:i + 2])
            if i == 2:
                h_out = h
        d = jnp.sum(h * params["wf_row"], axis=-1, keepdims=True) + params["bf"]
        return d, h_out

    return jax.vmap(single)(xg)


if __name__ == "__main__":
    # Module-consistent small shapes: opts.nfilterD = 8 -> dim = 128,
    # opts.latent_z_size = 32, per-group batch = 8, G = 4 fused groups
    # (e.g. warm-up states + generated frames batches fed through self.ds).
    G, B, Z, DIM = 4, 8, 32, 128

    key = jax.random.PRNGKey(0)
    k_x, k_p = jax.random.split(key)
    x = jax.random.normal(k_x, (G, B, Z), jnp.float32)
    params = make_params(k_p, Z, DIM)

    d_out, h_out = discriminator_single_latent(x, params)
    jax.block_until_ready((d_out, h_out))

    d_ref, h_ref = reference_forward(x, params)
    assert d_out.shape == (G, B, 1) and h_out.shape == (G, B, DIM)
    # bf16 matmul operands -> compare against the f32 reference at bf16-level tolerance
    assert jnp.allclose(d_out, d_ref, atol=5e-2, rtol=5e-2), \
        float(jnp.max(jnp.abs(d_out - d_ref)))
    assert jnp.allclose(h_out, h_ref, atol=5e-2, rtol=5e-2), \
        float(jnp.max(jnp.abs(h_out - h_ref)))

    print("KERNEL_OK")
</pallas_src>

<mosaic_0001>
module attributes {stable_mosaic.version = 11 : i64} {
  func.func @disc_kernel(%arg0: i32, %arg1: memref<1x8x32xf32, #tpu.memory_space<vmem>>, %arg2: memref<32x128xbf16, #tpu.memory_space<vmem>>, %arg3: memref<4x128x128xbf16, #tpu.memory_space<vmem>>, %arg4: memref<5x128xf32, #tpu.memory_space<vmem>>, %arg5: memref<5x128xf32, #tpu.memory_space<vmem>>, %arg6: memref<1x128xf32, #tpu.memory_space<vmem>>, %arg7: memref<1x1xf32, #tpu.memory_space<vmem>>, %arg8: memref<1x8x128xf32, #tpu.memory_space<vmem>>, %arg9: memref<1x8x128xf32, #tpu.memory_space<vmem>>) attributes {dimension_semantics = [#tpu.dimension_semantics<parallel>], iteration_bounds = array<i64: 4>, scalar_prefetch = 0 : i64, scratch_operands = 0 : i64, tpu.core_type = #tpu.core_type<tc>, window_params = [{transform_indices = @transform_0, window_bounds = array<i64: 1, 8, 32>}, {pipeline_mode = #tpu.pipeline_mode<synchronous>, transform_indices = @transform_1, window_bounds = array<i64: 32, 128>}, {pipeline_mode = #tpu.pipeline_mode<synchronous>, transform_indices = @transform_2, window_bounds = array<i64: 4, 128, 128>}, {pipeline_mode = #tpu.pipeline_mode<synchronous>, transform_indices = @transform_3, window_bounds = array<i64: 5, 128>}, {pipeline_mode = #tpu.pipeline_mode<synchronous>, transform_indices = @transform_4, window_bounds = array<i64: 5, 128>}, {pipeline_mode = #tpu.pipeline_mode<synchronous>, transform_indices = @transform_5, window_bounds = array<i64: 1, 128>}, {pipeline_mode = #tpu.pipeline_mode<synchronous>, transform_indices = @transform_6, window_bounds = array<i64: 1, 1>}, {transform_indices = @transform_7, window_bounds = array<i64: 1, 8, 128>}, {transform_indices = @transform_8, window_bounds = array<i64: 1, 8, 128>}]} {
    %c0 = arith.constant 0 : index
    %c0_0 = arith.constant 0 : index
    %c0_1 = arith.constant 0 : index
    %0 = vector.load %arg1[%c0, %c0_0, %c0_1] : memref<1x8x32xf32, #tpu.memory_space<vmem>>, vector<1x8x32xf32>
    %1 = vector.shape_cast %0 : vector<1x8x32xf32> to vector<8x32xf32>
    %2 = arith.truncf %1 : vector<8x32xf32> to vector<8x32xbf16>
    %c0_2 = arith.constant 0 : index
    %c0_3 = arith.constant 0 : index
    %3 = vector.load %arg2[%c0_2, %c0_3] : memref<32x128xbf16, #tpu.memory_space<vmem>>, vector<32x128xbf16>
    %cst = arith.constant dense<0.000000e+00> : vector<8x128xf32>
    %4 = tpu.matmul %2, %3, %cst {dimension_numbers = #tpu.dot_dimension_numbers<[1], [0], [0], [1], [0, 0, 1, 1], [], []>} : vector<8x32xbf16>, vector<32x128xbf16>, vector<8x128xf32> -> vector<8x128xf32>
    %c0_4 = arith.constant 0 : index
    %c0_5 = arith.constant 0 : index
    %5 = vector.load %arg4[%c0_4, %c0_5] : memref<5x128xf32, #tpu.memory_space<vmem>>, vector<1x128xf32>
    %c0_6 = arith.constant 0 : index
    %c0_7 = arith.constant 0 : index
    %6 = vector.load %arg5[%c0_6, %c0_7] : memref<5x128xf32, #tpu.memory_space<vmem>>, vector<1x128xf32>
    %cst_8 = arith.constant dense<0.000000e+00> : vector<128xf32>
    %7 = vector.multi_reduction <add>, %4, %cst_8 [0] : vector<8x128xf32> to vector<128xf32>
    %8 = vector.shape_cast %7 : vector<128xf32> to vector<1x128xf32>
    %cst_9 = arith.constant 8.000000e+00 : f32
    %9 = vector.broadcast %cst_9 : f32 to vector<1x128xf32>
    %10 = arith.divf %8, %9 : vector<1x128xf32>
    %11 = arith.mulf %4, %4 : vector<8x128xf32>
    %cst_10 = arith.constant dense<0.000000e+00> : vector<128xf32>
    %12 = vector.multi_reduction <add>, %11, %cst_10 [0] : vector<8x128xf32> to vector<128xf32>
    %13 = vector.shape_cast %12 : vector<128xf32> to vector<1x128xf32>
    %cst_11 = arith.constant 8.000000e+00 : f32
    %14 = vector.broadcast %cst_11 : f32 to vector<1x128xf32>
    %15 = arith.divf %13, %14 : vector<1x128xf32>
    %16 = arith.mulf %10, %10 : vector<1x128xf32>
    %17 = arith.subf %15, %16 : vector<1x128xf32>
    %cst_12 = arith.constant 0.000000e+00 : f32
    %18 = vector.broadcast %cst_12 : f32 to vector<1x128xf32>
    %19 = arith.maximumf %17, %18 : vector<1x128xf32>
    %cst_13 = arith.constant 9.99999974E-6 : f32
    %20 = vector.broadcast %cst_13 : f32 to vector<1x128xf32>
    %21 = arith.addf %19, %20 : vector<1x128xf32>
    %22 = math.rsqrt %21 : vector<1x128xf32>
    %23 = arith.mulf %5, %22 : vector<1x128xf32>
    %24 = arith.mulf %10, %23 : vector<1x128xf32>
    %25 = arith.subf %6, %24 : vector<1x128xf32>
    %26 = vector.broadcast %23 : vector<1x128xf32> to vector<8x128xf32>
    %27 = arith.mulf %4, %26 : vector<8x128xf32>
    %28 = vector.broadcast %25 : vector<1x128xf32> to vector<8x128xf32>
    %29 = arith.addf %27, %28 : vector<8x128xf32>
    %cst_14 = arith.constant 2.000000e-01 : f32
    %30 = vector.broadcast %cst_14 : f32 to vector<8x128xf32>
    %31 = arith.mulf %30, %29 : vector<8x128xf32>
    %32 = arith.maximumf %29, %31 : vector<8x128xf32>
    %33 = arith.truncf %32 : vector<8x128xf32> to vector<8x128xbf16>
    %c0_15 = arith.constant 0 : index
    %c0_16 = arith.constant 0 : index
    %c0_17 = arith.constant 0 : index
    %34 = vector.load %arg3[%c0_15, %c0_16, %c0_17] : memref<4x128x128xbf16, #tpu.memory_space<vmem>>, vector<1x128x128xbf16>
    %35 = vector.shape_cast %34 : vector<1x128x128xbf16> to vector<128x128xbf16>
    %cst_18 = arith.constant dense<0.000000e+00> : vector<8x128xf32>
    %36 = tpu.matmul %33, %35, %cst_18 {dimension_numbers = #tpu.dot_dimension_numbers<[1], [0], [0], [1], [0, 0, 1, 1], [], []>} : vector<8x128xbf16>, vector<128x128xbf16>, vector<8x128xf32> -> vector<8x128xf32>
    %c1 = arith.constant 1 : index
    %c0_19 = arith.constant 0 : index
    %37 = vector.load %arg4[%c1, %c0_19] : memref<5x128xf32, #tpu.memory_space<vmem>>, vector<1x128xf32>
    %c1_20 = arith.constant 1 : index
    %c0_21 = arith.constant 0 : index
    %38 = vector.load %arg5[%c1_20, %c0_21] : memref<5x128xf32, #tpu.memory_space<vmem>>, vector<1x128xf32>
    %cst_22 = arith.constant dense<0.000000e+00> : vector<128xf32>
    %39 = vector.multi_reduction <add>, %36, %cst_22 [0] : vector<8x128xf32> to vector<128xf32>
    %40 = vector.shape_cast %39 : vector<128xf32> to vector<1x128xf32>
    %cst_23 = arith.constant 8.000000e+00 : f32
    %41 = vector.broadcast %cst_23 : f32 to vector<1x128xf32>
    %42 = arith.divf %40, %41 : vector<1x128xf32>
    %43 = arith.mulf %36, %36 : vector<8x128xf32>
    %cst_24 = arith.constant dense<0.000000e+00> : vector<128xf32>
    %44 = vector.multi_reduction <add>, %43, %cst_24 [0] : vector<8x128xf32> to vector<128xf32>
    %45 = vector.shape_cast %44 : vector<128xf32> to vector<1x128xf32>
    %cst_25 = arith.constant 8.000000e+00 : f32
    %46 = vector.broadcast %cst_25 : f32 to vector<1x128xf32>
    %47 = arith.divf %45, %46 : vector<1x128xf32>
    %48 = arith.mulf %42, %42 : vector<1x128xf32>
    %49 = arith.subf %47, %48 : vector<1x128xf32>
    %cst_26 = arith.constant 0.000000e+00 : f32
    %50 = vector.broadcast %cst_26 : f32 to vector<1x128xf32>
    %51 = arith.maximumf %49, %50 : vector<1x128xf32>
    %cst_27 = arith.constant 9.99999974E-6 : f32
    %52 = vector.broadcast %cst_27 : f32 to vector<1x128xf32>
    %53 = arith.addf %51, %52 : vector<1x128xf32>
    %54 = math.rsqrt %53 : vector<1x128xf32>
    %55 = arith.mulf %37, %54 : vector<1x128xf32>
    %56 = arith.mulf %42, %55 : vector<1x128xf32>
    %57 = arith.subf %38, %56 : vector<1x128xf32>
    %58 = vector.broadcast %55 : vector<1x128xf32> to vector<8x128xf32>
    %59 = arith.mulf %36, %58 : vector<8x128xf32>
    %60 = vector.broadcast %57 : vector<1x128xf32> to vector<8x128xf32>
    %61 = arith.addf %59, %60 : vector<8x128xf32>
    %cst_28 = arith.constant 2.000000e-01 : f32
    %62 = vector.broadcast %cst_28 : f32 to vector<8x128xf32>
    %63 = arith.mulf %62, %61 : vector<8x128xf32>
    %64 = arith.maximumf %61, %63 : vector<8x128xf32>
    %65 = arith.truncf %64 : vector<8x128xf32> to vector<8x128xbf16>
    %c1_29 = arith.constant 1 : index
    %c0_30 = arith.constant 0 : index
    %c0_31 = arith.constant 0 : index
    %66 = vector.load %arg3[%c1_29, %c0_30, %c0_31] : memref<4x128x128xbf16, #tpu.memory_space<vmem>>, vector<1x128x128xbf16>
    %67 = vector.shape_cast %66 : vector<1x128x128xbf16> to vector<128x128xbf16>
    %cst_32 = arith.constant dense<0.000000e+00> : vector<8x128xf32>
    %68 = tpu.matmul %65, %67, %cst_32 {dimension_numbers = #tpu.dot_dimension_numbers<[1], [0], [0], [1], [0, 0, 1, 1], [], []>} : vector<8x128xbf16>, vector<128x128xbf16>, vector<8x128xf32> -> vector<8x128xf32>
    %c2 = arith.constant 2 : index
    %c0_33 = arith.constant 0 : index
    %69 = vector.load %arg4[%c2, %c0_33] : memref<5x128xf32, #tpu.memory_space<vmem>>, vector<1x128xf32>
    %c2_34 = arith.constant 2 : index
    %c0_35 = arith.constant 0 : index
    %70 = vector.load %arg5[%c2_34, %c0_35] : memref<5x128xf32, #tpu.memory_space<vmem>>, vector<1x128xf32>
    %cst_36 = arith.constant dense<0.000000e+00> : vector<128xf32>
    %71 = vector.multi_reduction <add>, %68, %cst_36 [0] : vector<8x128xf32> to vector<128xf32>
    %72 = vector.shape_cast %71 : vector<128xf32> to vector<1x128xf32>
    %cst_37 = arith.constant 8.000000e+00 : f32
    %73 = vector.broadcast %cst_37 : f32 to vector<1x128xf32>
    %74 = arith.divf %72, %73 : vector<1x128xf32>
    %75 = arith.mulf %68, %68 : vector<8x128xf32>
    %cst_38 = arith.constant dense<0.000000e+00> : vector<128xf32>
    %76 = vector.multi_reduction <add>, %75, %cst_38 [0] : vector<8x128xf32> to vector<128xf32>
    %77 = vector.shape_cast %76 : vector<128xf32> to vector<1x128xf32>
    %cst_39 = arith.constant 8.000000e+00 : f32
    %78 = vector.broadcast %cst_39 : f32 to vector<1x128xf32>
    %79 = arith.divf %77, %78 : vector<1x128xf32>
    %80 = arith.mulf %74, %74 : vector<1x128xf32>
    %81 = arith.subf %79, %80 : vector<1x128xf32>
    %cst_40 = arith.constant 0.000000e+00 : f32
    %82 = vector.broadcast %cst_40 : f32 to vector<1x128xf32>
    %83 = arith.maximumf %81, %82 : vector<1x128xf32>
    %cst_41 = arith.constant 9.99999974E-6 : f32
    %84 = vector.broadcast %cst_41 : f32 to vector<1x128xf32>
    %85 = arith.addf %83, %84 : vector<1x128xf32>
    %86 = math.rsqrt %85 : vector<1x128xf32>
    %87 = arith.mulf %69, %86 : vector<1x128xf32>
    %88 = arith.mulf %74, %87 : vector<1x128xf32>
    %89 = arith.subf %70, %88 : vector<1x128xf32>
    %90 = vector.broadcast %87 : vector<1x128xf32> to vector<8x128xf32>
    %91 = arith.mulf %68, %90 : vector<8x128xf32>
    %92 = vector.broadcast %89 : vector<1x128xf32> to vector<8x128xf32>
    %93 = arith.addf %91, %92 : vector<8x128xf32>
    %cst_42 = arith.constant 2.000000e-01 : f32
    %94 = vector.broadcast %cst_42 : f32 to vector<8x128xf32>
    %95 = arith.mulf %94, %93 : vector<8x128xf32>
    %96 = arith.maximumf %93, %95 : vector<8x128xf32>
    %97 = arith.truncf %96 : vector<8x128xf32> to vector<8x128xbf16>
    %c2_43 = arith.constant 2 : index
    %c0_44 = arith.constant 0 : index
    %c0_45 = arith.constant 0 : index
    %98 = vector.load %arg3[%c2_43, %c0_44, %c0_45] : memref<4x128x128xbf16, #tpu.memory_space<vmem>>, vector<1x128x128xbf16>
    %99 = vector.shape_cast %98 : vector<1x128x128xbf16> to vector<128x128xbf16>
    %cst_46 = arith.constant dense<0.000000e+00> : vector<8x128xf32>
    %100 = tpu.matmul %97, %99, %cst_46 {dimension_numbers = #tpu.dot_dimension_numbers<[1], [0], [0], [1], [0, 0, 1, 1], [], []>} : vector<8x128xbf16>, vector<128x128xbf16>, vector<8x128xf32> -> vector<8x128xf32>
    %c3 = arith.constant 3 : index
    %c0_47 = arith.constant 0 : index
    %101 = vector.load %arg4[%c3, %c0_47] : memref<5x128xf32, #tpu.memory_space<vmem>>, vector<1x128xf32>
    %c3_48 = arith.constant 3 : index
    %c0_49 = arith.constant 0 : index
    %102 = vector.load %arg5[%c3_48, %c0_49] : memref<5x128xf32, #tpu.memory_space<vmem>>, vector<1x128xf32>
    %cst_50 = arith.constant dense<0.000000e+00> : vector<128xf32>
    %103 = vector.multi_reduction <add>, %100, %cst_50 [0] : vector<8x128xf32> to vector<128xf32>
    %104 = vector.shape_cast %103 : vector<128xf32> to vector<1x128xf32>
    %cst_51 = arith.constant 8.000000e+00 : f32
    %105 = vector.broadcast %cst_51 : f32 to vector<1x128xf32>
    %106 = arith.divf %104, %105 : vector<1x128xf32>
    %107 = arith.mulf %100, %100 : vector<8x128xf32>
    %cst_52 = arith.constant dense<0.000000e+00> : vector<128xf32>
    %108 = vector.multi_reduction <add>, %107, %cst_52 [0] : vector<8x128xf32> to vector<128xf32>
    %109 = vector.shape_cast %108 : vector<128xf32> to vector<1x128xf32>
    %cst_53 = arith.constant 8.000000e+00 : f32
    %110 = vector.broadcast %cst_53 : f32 to vector<1x128xf32>
    %111 = arith.divf %109, %110 : vector<1x128xf32>
    %112 = arith.mulf %106, %106 : vector<1x128xf32>
    %113 = arith.subf %111, %112 : vector<1x128xf32>
    %cst_54 = arith.constant 0.000000e+00 : f32
    %114 = vector.broadcast %cst_54 : f32 to vector<1x128xf32>
    %115 = arith.maximumf %113, %114 : vector<1x128xf32>
    %cst_55 = arith.constant 9.99999974E-6 : f32
    %116 = vector.broadcast %cst_55 : f32 to vector<1x128xf32>
    %117 = arith.addf %115, %116 : vector<1x128xf32>
    %118 = math.rsqrt %117 : vector<1x128xf32>
    %119 = arith.mulf %101, %118 : vector<1x128xf32>
    %120 = arith.mulf %106, %119 : vector<1x128xf32>
    %121 = arith.subf %102, %120 : vector<1x128xf32>
    %122 = vector.broadcast %119 : vector<1x128xf32> to vector<8x128xf32>
    %123 = arith.mulf %100, %122 : vector<8x128xf32>
    %124 = vector.broadcast %121 : vector<1x128xf32> to vector<8x128xf32>
    %125 = arith.addf %123, %124 : vector<8x128xf32>
    %cst_56 = arith.constant 2.000000e-01 : f32
    %126 = vector.broadcast %cst_56 : f32 to vector<8x128xf32>
    %127 = arith.mulf %126, %125 : vector<8x128xf32>
    %128 = arith.maximumf %125, %127 : vector<8x128xf32>
    %c0_57 = arith.constant 0 : index
    %c0_58 = arith.constant 0 : index
    %c0_59 = arith.constant 0 : index
    %129 = vector.load %arg9[%c0_57, %c0_58, %c0_59] : memref<1x8x128xf32, #tpu.memory_space<vmem>>, vector<1x8x128xf32>
    %130 = vector.shape_cast %129 : vector<1x8x128xf32> to vector<8x128xf32>
    %131 = vector.shape_cast %128 : vector<8x128xf32> to vector<1x8x128xf32>
    tpu.vector_store %arg9[%c0_57, %c0_58, %c0_59], %131 {strides = array<i32>} : memref<1x8x128xf32, #tpu.memory_space<vmem>>, vector<1x8x128xf32>,
    %132 = arith.truncf %128 : vector<8x128xf32> to vector<8x128xbf16>
    %c3_60 = arith.constant 3 : index
    %c0_61 = arith.constant 0 : index
    %c0_62 = arith.constant 0 : index
    %133 = vector.load %arg3[%c3_60, %c0_61, %c0_62] : memref<4x128x128xbf16, #tpu.memory_space<vmem>>, vector<1x128x128xbf16>
    %134 = vector.shape_cast %133 : vector<1x128x128xbf16> to vector<128x128xbf16>
    %cst_63 = arith.constant dense<0.000000e+00> : vector<8x128xf32>
    %135 = tpu.matmul %132, %134, %cst_63 {dimension_numbers = #tpu.dot_dimension_numbers<[1], [0], [0], [1], [0, 0, 1, 1], [], []>} : vector<8x128xbf16>, vector<128x128xbf16>, vector<8x128xf32> -> vector<8x128xf32>
    %c4 = arith.constant 4 : index
    %c0_64 = arith.constant 0 : index
    %136 = vector.load %arg4[%c4, %c0_64] : memref<5x128xf32, #tpu.memory_space<vmem>>, vector<1x128xf32>
    %c4_65 = arith.constant 4 : index
    %c0_66 = arith.constant 0 : index
    %137 = vector.load %arg5[%c4_65, %c0_66] : memref<5x128xf32, #tpu.memory_space<vmem>>, vector<1x128xf32>
    %cst_67 = arith.constant dense<0.000000e+00> : vector<128xf32>
    %138 = vector.multi_reduction <add>, %135, %cst_67 [0] : vector<8x128xf32> to vector<128xf32>
    %139 = vector.shape_cast %138 : vector<128xf32> to vector<1x128xf32>
    %cst_68 = arith.constant 8.000000e+00 : f32
    %140 = vector.broadcast %cst_68 : f32 to vector<1x128xf32>
    %141 = arith.divf %139, %140 : vector<1x128xf32>
    %142 = arith.mulf %135, %135 : vector<8x128xf32>
    %cst_69 = arith.constant dense<0.000000e+00> : vector<128xf32>
    %143 = vector.multi_reduction <add>, %142, %cst_69 [0] : vector<8x128xf32> to vector<128xf32>
    %144 = vector.shape_cast %143 : vector<128xf32> to vector<1x128xf32>
    %cst_70 = arith.constant 8.000000e+00 : f32
    %145 = vector.broadcast %cst_70 : f32 to vector<1x128xf32>
    %146 = arith.divf %144, %145 : vector<1x128xf32>
    %147 = arith.mulf %141, %141 : vector<1x128xf32>
    %148 = arith.subf %146, %147 : vector<1x128xf32>
    %cst_71 = arith.constant 0.000000e+00 : f32
    %149 = vector.broadcast %cst_71 : f32 to vector<1x128xf32>
    %150 = arith.maximumf %148, %149 : vector<1x128xf32>
    %cst_72 = arith.constant 9.99999974E-6 : f32
    %151 = vector.broadcast %cst_72 : f32 to vector<1x128xf32>
    %152 = arith.addf %150, %151 : vector<1x128xf32>
    %153 = math.rsqrt %152 : vector<1x128xf32>
    %154 = arith.mulf %136, %153 : vector<1x128xf32>
    %155 = arith.mulf %141, %154 : vector<1x128xf32>
    %156 = arith.subf %137, %155 : vector<1x128xf32>
    %157 = vector.broadcast %154 : vector<1x128xf32> to vector<8x128xf32>
    %158 = arith.mulf %135, %157 : vector<8x128xf32>
    %159 = vector.broadcast %156 : vector<1x128xf32> to vector<8x128xf32>
    %160 = arith.addf %158, %159 : vector<8x128xf32>
    %cst_73 = arith.constant 2.000000e-01 : f32
    %161 = vector.broadcast %cst_73 : f32 to vector<8x128xf32>
    %162 = arith.mulf %161, %160 : vector<8x128xf32>
    %163 = arith.maximumf %160, %162 : vector<8x128xf32>
    %c0_74 = arith.constant 0 : index
    %c0_75 = arith.constant 0 : index
    %164 = vector.load %arg6[%c0_74, %c0_75] : memref<1x128xf32, #tpu.memory_space<vmem>>, vector<1x128xf32>
    %165 = vector.broadcast %164 : vector<1x128xf32> to vector<8x128xf32>
    %166 = arith.mulf %163, %165 : vector<8x128xf32>
    %cst_76 = arith.constant dense<0.000000e+00> : vector<8xf32>
    %167 = vector.multi_reduction <add>, %166, %cst_76 [1] : vector<8x128xf32> to vector<8xf32>
    %168 = vector.shape_cast %167 : vector<8xf32> to vector<8x1xf32>
    %c0_77 = arith.constant 0 : index
    %c0_78 = arith.constant 0 : index
    %169 = vector.load %arg7[%c0_77, %c0_78] : memref<1x1xf32, #tpu.memory_space<vmem>>, vector<1x1xf32>
    %170 = vector.broadcast %169 : vector<1x1xf32> to vector<8x1xf32>
    %171 = arith.addf %168, %170 : vector<8x1xf32>
    %172 = vector.shape_cast %171 : vector<8x1xf32> to vector<8x1xf32>
    %173 = vector.broadcast %172 : vector<8x1xf32> to vector<8x128xf32>
    %c0_79 = arith.constant 0 : index
    %c0_80 = arith.constant 0 : index
    %c0_81 = arith.constant 0 : index
    %174 = vector.load %arg8[%c0_79, %c0_80, %c0_81] : memref<1x8x128xf32, #tpu.memory_space<vmem>>, vector<1x8x128xf32>
    %175 = vector.shape_cast %174 : vector<1x8x128xf32> to vector<8x128xf32>
    %176 = vector.shape_cast %173 : vector<8x128xf32> to vector<1x8x128xf32>
    tpu.vector_store %arg8[%c0_79, %c0_80, %c0_81], %176 {strides = array<i32>} : memref<1x8x128xf32, #tpu.memory_space<vmem>>, vector<1x8x128xf32>,
    return
  }
  func.func @transform_0(%arg0: i32) -> (i32, i32, i32) {
    %c0_i32 = arith.constant 0 : i32
    %c0_i32_0 = arith.constant 0 : i32
    %c0_i32_1 = arith.constant 0 : i32
    return %arg0, %c0_i32, %c0_i32_0 : i32, i32, i32
  }
  func.func @transform_1(%arg0: i32) -> (i32, i32) {
    %c0_i32 = arith.constant 0 : i32
    %c0_i32_0 = arith.constant 0 : i32
    %c0_i32_1 = arith.constant 0 : i32
    return %c0_i32, %c0_i32_0 : i32, i32
  }
  func.func @transform_2(%arg0: i32) -> (i32, i32, i32) {
    %c0_i32 = arith.constant 0 : i32
    %c0_i32_0 = arith.constant 0 : i32
    %c0_i32_1 = arith.constant 0 : i32
    %c0_i32_2 = arith.constant 0 : i32
    return %c0_i32, %c0_i32_0, %c0_i32_1 : i32, i32, i32
  }
  func.func @transform_3(%arg0: i32) -> (i32, i32) {
    %c0_i32 = arith.constant 0 : i32
    %c0_i32_0 = arith.constant 0 : i32
    %c0_i32_1 = arith.constant 0 : i32
    return %c0_i32, %c0_i32_0 : i32, i32
  }
  func.func @transform_4(%arg0: i32) -> (i32, i32) {
    %c0_i32 = arith.constant 0 : i32
    %c0_i32_0 = arith.constant 0 : i32
    %c0_i32_1 = arith.constant 0 : i32
    return %c0_i32, %c0_i32_0 : i32, i32
  }
  func.func @transform_5(%arg0: i32) -> (i32, i32) {
    %c0_i32 = arith.constant 0 : i32
    %c0_i32_0 = arith.constant 0 : i32
    %c0_i32_1 = arith.constant 0 : i32
    return %c0_i32, %c0_i32_0 : i32, i32
  }
  func.func @transform_6(%arg0: i32) -> (i32, i32) {
    %c0_i32 = arith.constant 0 : i32
    %c0_i32_0 = arith.constant 0 : i32
    %c0_i32_1 = arith.constant 0 : i32
    return %c0_i32, %c0_i32_0 : i32, i32
  }
  func.func @transform_7(%arg0: i32) -> (i32, i32, i32) {
    %c0_i32 = arith.constant 0 : i32
    %c0_i32_0 = arith.constant 0 : i32
    %c0_i32_1 = arith.constant 0 : i32
    return %arg0, %c0_i32, %c0_i32_0 : i32, i32, i32
  }
  func.func @transform_8(%arg0: i32) -> (i32, i32, i32) {
    %c0_i32 = arith.constant 0 : i32
    %c0_i32_0 = arith.constant 0 : i32
    %c0_i32_1 = arith.constant 0 : i32
    return %arg0, %c0_i32, %c0_i32_0 : i32, i32, i32
  }
}

</mosaic_0001>

<llo_original>
// kernel: discriminator_single_latent.1
$region0: #{discriminator_single_latent.1}
  #allocation0 [shape = 'u32[]', space=smem, size = 0x4, offset = 0x4, fixed_abs, tag = 'smem constant byte address 0x4 - core index']
  #allocation1 [shape = 'u32[144,128]{1,0:T(1,128)}', space=vmem, size = 0x12000, scoped, tag = 'internal scratch']
  #allocation2 [shape = 'f32[1,1]{1,0:T(1,128)S(1)}', space=vmem, size = 0x200, scoped, tag = 'scoped memory for discriminator_single_latent.1']
  %s0 = inlined_call_operand.hbm [shape: f32[4,8,32], index: 0, kind: input, shape index: {}]
  %s1 = inlined_call_operand.hbm [shape: bf16[32,128], index: 1, kind: input, shape index: {}]
  %s2 = inlined_call_operand.hbm [shape: bf16[4,128,128], index: 2, kind: input, shape index: {}]
  %s3 = inlined_call_operand.vmem [shape: f32[5,128], index: 3, kind: input, shape index: {}]
  %s4 = inlined_call_operand.hbm [shape: f32[5,128], index: 4, kind: input, shape index: {}]
  %s5 = inlined_call_operand.vmem [shape: f32[1,128], index: 5, kind: input, shape index: {}]
  %s6 = inlined_call_operand.<no memory space> [shape: f32[1,1], index: 6, kind: input, shape index: {}]
  %s7 = inlined_call_operand.vmem [shape: f32[4,8,128], index: 7, kind: output, shape index: {0}]
  %s8 = inlined_call_operand.hbm [shape: f32[4,8,128], index: 8, kind: output, shape index: {1}]
  %9 = xla_tuple %s7, %s8
  %s10 = sld [smem:[#allocation0]]
  $region85: #{discriminator_single_latent.1} parent=0
    _
  %s12 = ssub.s32 1, %s10
  %s13 = scalar_select 0, %s12, %s10
  %v14 = vstv %s6
  %15 = vst [vmem:[#allocation2] sm:$0x1] %v14
  $region1: #{discriminator_single_latent.1} parent=0
    #allocation3 [shape = 'u8[8192]{0}', space=vmem, size = 0x2000, scoped, tag = 'input window, operand 0']
    #allocation4 [shape = 's32[2]{0}', space=sflag, size = 0x8, scoped, tag = 'scoped memory for discriminator_single_latent.1']
    #allocation5 [shape = 's32[2]{0}', space=sflag, size = 0x8, scoped, tag = 'scoped memory for discriminator_single_latent.1']
    #allocation6 [shape = 'u8[8192]{0}', space=vmem, size = 0x2000, scoped, tag = 'input window, operand 1, single buffered']
    #allocation7 [shape = 's32[1]{0}', space=sflag, size = 0x4, scoped, tag = 'scoped memory for discriminator_single_latent.1']
    #allocation8 [shape = 'u8[131072]{0}', space=vmem, size = 0x20000, scoped, tag = 'input window, operand 2, single buffered']
    #allocation9 [shape = 'u8[4096]{0}', space=vmem, size = 0x1000, scoped, tag = 'input window, operand 4, single buffered']
    #allocation10 [shape = 's32[1]{0}', space=sflag, size = 0x4, scoped, tag = 'scoped memory for discriminator_single_latent.1']
    #allocation11 [shape = 'u8[8192]{0}', space=vmem, size = 0x2000, scoped, tag = 'output window, operand 1']
    %16 = vsyncpa [#allocation4], 0
    %s17 = scalar_lea.sflag [#allocation4], 1
    %18 = vsyncpa %s17, 0
    %19 = vsyncpa [#allocation7], 0
    %20 = vsyncpa [#allocation10], 0
    %21 = vsyncpa [#allocation5], 0
    %s22 = scalar_lea.sflag [#allocation5], 1
    %23 = vsyncpa %s22, 0
    loop: start=0, step=1, limit=6
    $region2: #{discriminator_single_latent.1} parent=1 // loop_pre_header
      _
    $region3: #{discriminator_single_latent.1} parent=1 // loop_header
      %s25 = sphi 0, %s29
      %p26 = scmp.ge.s32.totalorder %s25, 6
      %s35 = sphi 0, %s37
      %s38 = sphi 0, %s35
      %s39 = sphi 0, %s38
      %s55 = sphi 0, %s39
      %s59 = sphi 0, %s59
      %s61 = sphi 0, %s59
      %s62 = sphi 0, %s61
      %s76 = sphi 0, %s62
      %s80 = sphi 0, %s80
      %s82 = sphi 0, %s80
      %s83 = sphi 0, %s82
      %s97 = sphi 0, %s83
      %s101 = sphi 0, %s101
      %s103 = sphi 0, %s101
      %s104 = sphi 0, %s103
      %s118 = sphi 0, %s104
      %s122 = sphi 0, %s122
      %s124 = sphi 0, %s122
      %s125 = sphi 0, %s124
      %s139 = sphi 0, %s125
      %s143 = sphi 0, %s143
      %s145 = sphi 0, %s143
      %s146 = sphi 0, %s145
      %s160 = sphi 0, %s146
      %s164 = sphi 0, %s164
      %s166 = sphi 0, %s164
      %s167 = sphi 0, %s166
      %s181 = sphi 0, %s167
      %s187 = sphi 0, %s189
      %s190 = sphi 0, %s187
      %s191 = sphi 0, %s190
      %s207 = sphi 0, %s191
      %s213 = sphi 0, %s215
      %s216 = sphi 0, %s213
      %s217 = sphi 0, %s216
      %s233 = sphi 0, %s217
    $region4: #{discriminator_single_latent.1} parent=1 // loop_header_branch
      %28 = sbr.rel (%p26) target = $region8
    $region5: #{discriminator_single_latent.1} parent=1 // loop_body
      %s30 = ssub.s32 %s25, 1
      %s31 = ssub.s32 %s25, 2
      %s32 = sadd.s32 %s25, 1
      %s33 = ssub.s32 %s25, %s32
      %p34 = scmp.eq.s32.totalorder %s33, 0
      %s36 = sadd.s32 %s35, 1
      %s37 = scalar_select %p34, %s35, %s36
      %p40 = pneg %p34
      %p41 = scmp.eq.s32.totalorder %s25, 3
      %p42 = por %p40, %p41
      %p43 = scmp.ne.s32.totalorder %s35, %s38
      %p44 = scmp.eq.s32.totalorder %s25, 0
      %p45 = por %p43, %p44
      %p46 = scmp.ne.s32.totalorder %s35, %s38
      %p47 = scmp.eq.s32.totalorder %s30, 3
      %p48 = por %p46, %p47
      %p49 = scmp.ne.s32.totalorder %s38, %s39
      %p50 = scmp.eq.s32.totalorder %s30, 0
      %p51 = por %p49, %p50
      %p52 = scmp.ne.s32.totalorder %s38, %s39
      %p53 = scmp.eq.s32.totalorder %s31, 3
      %p54 = por %p52, %p53
      %p56 = scmp.ne.s32.totalorder %s39, %s55
      %p57 = scmp.eq.s32.totalorder %s31, 0
      %p58 = por %p56, %p57
      %s60 = sadd.s32 %s59, 1
      %p63 = scmp.eq.s32.totalorder %s25, 3
      %p64 = scmp.ne.s32.totalorder %s59, %s61
      %p65 = scmp.eq.s32.totalorder %s25, 0
      %p66 = por %p64, %p65
      %p67 = scmp.ne.s32.totalorder %s59, %s61
      %p68 = scmp.eq.s32.totalorder %s30, 3
      %p69 = por %p67, %p68
      %p70 = scmp.ne.s32.totalorder %s61, %s62
      %p71 = scmp.eq.s32.totalorder %s30, 0
      %p72 = por %p70, %p71
      %p73 = scmp.ne.s32.totalorder %s61, %s62
      %p74 = scmp.eq.s32.totalorder %s31, 3
      %p75 = por %p73, %p74
      %p77 = scmp.ne.s32.totalorder %s62, %s76
      %p78 = scmp.eq.s32.totalorder %s31, 0
      %p79 = por %p77, %p78
      %s81 = sadd.s32 %s80, 1
      %p84 = scmp.eq.s32.totalorder %s25, 3
      %p85 = scmp.ne.s32.totalorder %s80, %s82
      %p86 = scmp.eq.s32.totalorder %s25, 0
      %p87 = por %p85, %p86
      %p88 = scmp.ne.s32.totalorder %s80, %s82
      %p89 = scmp.eq.s32.totalorder %s30, 3
      %p90 = por %p88, %p89
      %p91 = scmp.ne.s32.totalorder %s82, %s83
      %p92 = scmp.eq.s32.totalorder %s30, 0
      %p93 = por %p91, %p92
      %p94 = scmp.ne.s32.totalorder %s82, %s83
      %p95 = scmp.eq.s32.totalorder %s31, 3
      %p96 = por %p94, %p95
      %p98 = scmp.ne.s32.totalorder %s83, %s97
      %p99 = scmp.eq.s32.totalorder %s31, 0
      %p100 = por %p98, %p99
      %s102 = sadd.s32 %s101, 1
      %p105 = scmp.eq.s32.totalorder %s25, 3
      %p106 = scmp.ne.s32.totalorder %s101, %s103
      %p107 = scmp.eq.s32.totalorder %s25, 0
      %p108 = por %p106, %p107
      %p109 = scmp.ne.s32.totalorder %s101, %s103
      %p110 = scmp.eq.s32.totalorder %s30, 3
      %p111 = por %p109, %p110
      %p112 = scmp.ne.s32.totalorder %s103, %s104
      %p113 = scmp.eq.s32.totalorder %s30, 0
      %p114 = por %p112, %p113
      %p115 = scmp.ne.s32.totalorder %s103, %s104
      %p116 = scmp.eq.s32.totalorder %s31, 3
      %p117 = por %p115, %p116
      %p119 = scmp.ne.s32.totalorder %s104, %s118
      %p120 = scmp.eq.s32.totalorder %s31, 0
      %p121 = por %p119, %p120
      %s123 = sadd.s32 %s122, 1
      %p126 = scmp.eq.s32.totalorder %s25, 3
      %p127 = scmp.ne.s32.totalorder %s122, %s124
      %p128 = scmp.eq.s32.totalorder %s25, 0
      %p129 = por %p127, %p128
      %p130 = scmp.ne.s32.totalorder %s122, %s124
      %p131 = scmp.eq.s32.totalorder %s30, 3
      %p132 = por %p130, %p131
      %p133 = scmp.ne.s32.totalorder %s124, %s125
      %p134 = scmp.eq.s32.totalorder %s30, 0
      %p135 = por %p133, %p134
      %p136 = scmp.ne.s32.totalorder %s124, %s125
      %p137 = scmp.eq.s32.totalorder %s31, 3
      %p138 = por %p136, %p137
      %p140 = scmp.ne.s32.totalorder %s125, %s139
      %p141 = scmp.eq.s32.totalorder %s31, 0
      %p142 = por %p140, %p141
      %s144 = sadd.s32 %s143, 1
      %p147 = scmp.eq.s32.totalorder %s25, 3
      %p148 = scmp.ne.s32.totalorder %s143, %s145
      %p149 = scmp.eq.s32.totalorder %s25, 0
      %p150 = por %p148, %p149
      %p151 = scmp.ne.s32.totalorder %s143, %s145
      %p152 = scmp.eq.s32.totalorder %s30, 3
      %p153 = por %p151, %p152
      %p154 = scmp.ne.s32.totalorder %s145, %s146
      %p155 = scmp.eq.s32.totalorder %s30, 0
      %p156 = por %p154, %p155
      %p157 = scmp.ne.s32.totalorder %s145, %s146
      %p158 = scmp.eq.s32.totalorder %s31, 3
      %p159 = por %p157, %p158
      %p161 = scmp.ne.s32.totalorder %s146, %s160
      %p162 = scmp.eq.s32.totalorder %s31, 0
      %p163 = por %p161, %p162
      %s165 = sadd.s32 %s164, 1
      %p168 = scmp.eq.s32.totalorder %s25, 3
      %p169 = scmp.ne.s32.totalorder %s164, %s166
      %p170 = scmp.eq.s32.totalorder %s25, 0
      %p171 = por %p169, %p170
      %p172 = scmp.ne.s32.totalorder %s164, %s166
      %p173 = scmp.eq.s32.totalorder %s30, 3
      %p174 = por %p172, %p173
      %p175 = scmp.ne.s32.totalorder %s166, %s167
      %p176 = scmp.eq.s32.totalorder %s30, 0
      %p177 = por %p175, %p176
      %p178 = scmp.ne.s32.totalorder %s166, %s167
      %p179 = scmp.eq.s32.totalorder %s31, 3
      %p180 = por %p178, %p179
      %p182 = scmp.ne.s32.totalorder %s167, %s181
      %p183 = scmp.eq.s32.totalorder %s31, 0
      %p184 = por %p182, %p183
      %s185 = ssub.s32 %s25, %s32
      %p186 = scmp.eq.s32.totalorder %s185, 0
      %s188 = sadd.s32 %s187, 1
      %s189 = scalar_select %p186, %s187, %s188
      %p192 = pneg %p186
      %p193 = scmp.eq.s32.totalorder %s25, 3
      %p194 = por %p192, %p193
      %p195 = scmp.ne.s32.totalorder %s187, %s190
      %p196 = scmp.eq.s32.totalorder %s25, 0
      %p197 = por %p195, %p196
      %p198 = scmp.ne.s32.totalorder %s187, %s190
      %p199 = scmp.eq.s32.totalorder %s30, 3
      %p200 = por %p198, %p199
      %p201 = scmp.ne.s32.totalorder %s190, %s191
      %p202 = scmp.eq.s32.totalorder %s30, 0
      %p203 = por %p201, %p202
      %p204 = scmp.ne.s32.totalorder %s190, %s191
      %p205 = scmp.eq.s32.totalorder %s31, 3
      %p206 = por %p204, %p205
      %p208 = scmp.ne.s32.totalorder %s191, %s207
      %p209 = scmp.eq.s32.totalorder %s31, 0
      %p210 = por %p208, %p209
      %s211 = ssub.s32 %s25, %s32
      %p212 = scmp.eq.s32.totalorder %s211, 0
      %s214 = sadd.s32 %s213, 1
      %s215 = scalar_select %p212, %s213, %s214
      %p218 = pneg %p212
      %p219 = scmp.eq.s32.totalorder %s25, 3
      %p220 = por %p218, %p219
      %p221 = scmp.ne.s32.totalorder %s213, %s216
      %p222 = scmp.eq.s32.totalorder %s25, 0
      %p223 = por %p221, %p222
      %p224 = scmp.ne.s32.totalorder %s213, %s216
      %p225 = scmp.eq.s32.totalorder %s30, 3
      %p226 = por %p224, %p225
      %p227 = scmp.ne.s32.totalorder %s216, %s217
      %p228 = scmp.eq.s32.totalorder %s30, 0
      %p229 = por %p227, %p228
      %p230 = scmp.ne.s32.totalorder %s216, %s217
      %p231 = scmp.eq.s32.totalorder %s31, 3
      %p232 = por %p230, %p231
      %p234 = scmp.ne.s32.totalorder %s217, %s233
      %p235 = scmp.eq.s32.totalorder %s31, 0
      %p236 = por %p234, %p235
      %p237 = scmp.le.s32.totalorder 1, %s25
      %p238 = scmp.lt.s32.totalorder %s25, 5
      %p239 = pnand %p237, %p238
      %p240 = pneg %p239
      // Predicated region
      $region9: #{discriminator_single_latent.1} parent=5 // pred_check
        _
      $region10: #{discriminator_single_latent.1} parent=5 // pred_check_branch
        %242 = sbr.rel (%p239) target = $region12
      $region11: #{discriminator_single_latent.1} parent=5 // pred_region
        %s243 = ssub.s32 %s25, 1
        // Predicated region
        $region13: #{discriminator_single_latent.1} parent=11 // pred_check
          %p244 = pneg %p72
        $region14: #{discriminator_single_latent.1} parent=11 // pred_check_branch
          %246 = sbr.rel (%p244) target = $region16
        $region15: #{discriminator_single_latent.1} parent=11 // pred_region
          %s248 = ssub.s32 256, 256
          %249 = vsyncadd [#allocation7], %s248
          %s250 = sshll.u32 [#allocation6], 4
          %s251 = int_to_ptr.vmem [resolvable:$true] %s250
          %256 = dma.hbm_to_vmem [thread:$0]  %s1, 256, %s251, [#allocation7], 64, 64, 4
        $region16: #{discriminator_single_latent.1} parent=11 // pred_fallthru
          _
        // Predicated region
        $region17: #{discriminator_single_latent.1} parent=11 // pred_check
          %p257 = pneg %p93
        $region18: #{discriminator_single_latent.1} parent=11 // pred_check_branch
          %259 = sbr.rel (%p257) target = $region20
        $region19: #{discriminator_single_latent.1} parent=11 // pred_region
          %s261 = ssub.s32 4096, 4096
          %262 = vsyncadd [#allocation7], %s261
          %s263 = sshll.u32 [#allocation8], 4
          %s264 = int_to_ptr.vmem [resolvable:$true] %s263
          %269 = dma.hbm_to_vmem [thread:$0]  %s2, 4096, %s264, [#allocation7], 64, 64, 4
        $region20: #{discriminator_single_latent.1} parent=11 // pred_fallthru
          _
        // Predicated region
        $region21: #{discriminator_single_latent.1} parent=11 // pred_check
          %p270 = pneg %p114
        $region22: #{discriminator_single_latent.1} parent=11 // pred_check_branch
          %272 = sbr.rel (%p270) target = $region24
        $region23: #{discriminator_single_latent.1} parent=11 // pred_region
          _
        $region24: #{discriminator_single_latent.1} parent=11 // pred_fallthru
          _
        // Predicated region
        $region25: #{discriminator_single_latent.1} parent=11 // pred_check
          %p273 = pneg %p135
        $region26: #{discriminator_single_latent.1} parent=11 // pred_check_branch
          %275 = sbr.rel (%p273) target = $region28
        $region27: #{discriminator_single_latent.1} parent=11 // pred_region
          %s277 = ssub.s32 128, 128
          %278 = vsyncadd [#allocation10], %s277
          %s280 = sshll.u32 [#allocation9], 4
          %s281 = int_to_ptr.vmem [resolvable:$true] %s280
          %283 = dma.hbm_to_vmem [thread:$0]  %s4, 128, %s281, [#allocation10]
        $region28: #{discriminator_single_latent.1} parent=11 // pred_fallthru
          _
        // Predicated region
        $region29: #{discriminator_single_latent.1} parent=11 // pred_check
          %p284 = pneg %p156
        $region30: #{discriminator_single_latent.1} parent=11 // pred_check_branch
          %286 = sbr.rel (%p284) target = $region32
        $region31: #{discriminator_single_latent.1} parent=11 // pred_region
          _
        $region32: #{discriminator_single_latent.1} parent=11 // pred_fallthru
          _
        // Predicated region
        $region33: #{discriminator_single_latent.1} parent=11 // pred_check
          %p287 = pneg %p177
        $region34: #{discriminator_single_latent.1} parent=11 // pred_check_branch
          %289 = sbr.rel (%p287) target = $region36
        $region35: #{discriminator_single_latent.1} parent=11 // pred_region
          _
        $region36: #{discriminator_single_latent.1} parent=11 // pred_fallthru
          _
      $region12: #{discriminator_single_latent.1} parent=5 // pred_fallthru
        _
      %p290 = scmp.lt.s32.totalorder %s25, 4
      // Predicated region
      $region37: #{discriminator_single_latent.1} parent=5 // pred_check
        %p291 = pneg %p290
      $region38: #{discriminator_single_latent.1} parent=5 // pred_check_branch
        %293 = sbr.rel (%p291) target = $region40
      $region39: #{discriminator_single_latent.1} parent=5 // pred_region
        // Predicated region
        $region41: #{discriminator_single_latent.1} parent=39 // pred_check
          %p294 = pneg %p45
        $region42: #{discriminator_single_latent.1} parent=39 // pred_check_branch
          %296 = sbr.rel (%p294) target = $region44
        $region43: #{discriminator_single_latent.1} parent=39 // pred_region
          %s297 = sand.u32 %s35, 1
          %s298 = scalar_lea.sflag [#allocation4], %s297
          %s299 = sand.u32 %s35, 1
          %s300 = smul.addr %s299, 8
          %s301 = scalar_lea.vmem [#allocation3], %s300
          %s303 = ssub.s32 128, 128
          %304 = vsyncadd %s298, %s303
          %s305 = smul.addr %s25, 128
          %s306 = scalar_lea.hbm %s0, %s305
          %s308 = sshll.u32 %s301, 4
          %s309 = int_to_ptr.vmem [resolvable:$true] %s308
          %311 = dma.hbm_to_vmem [thread:$0]  %s306, 128, %s309, %s298
        $region44: #{discriminator_single_latent.1} parent=39 // pred_fallthru
          _
      $region40: #{discriminator_single_latent.1} parent=5 // pred_fallthru
        _
      %p312 = scmp.le.s32.totalorder 1, %s25
      %p313 = scmp.lt.s32.totalorder %s25, 5
      %p314 = pnand %p312, %p313
      %p315 = pneg %p314
      // Predicated region
      $region45: #{discriminator_single_latent.1} parent=5 // pred_check
        _
      $region46: #{discriminator_single_latent.1} parent=5 // pred_check_branch
        %317 = sbr.rel (%p314) target = $region48
      $region47: #{discriminator_single_latent.1} parent=5 // pred_region
        %s318 = ssub.s32 %s25, 1
        %s319 = sand.u32 %s38, 1
        %s320 = scalar_lea.sflag [#allocation4], %s319
        %s321 = sand.u32 %s38, 1
        %s322 = smul.addr %s321, 8
        %s323 = scalar_lea.vmem [#allocation3], %s322
        // Predicated region
        $region49: #{discriminator_single_latent.1} parent=47 // pred_check
          %p324 = pneg %p51
        $region50: #{discriminator_single_latent.1} parent=47 // pred_check_branch
          %326 = sbr.rel (%p324) target = $region52
        $region51: #{discriminator_single_latent.1} parent=47 // pred_region
          %327 = dma.done %s320, 128
        $region52: #{discriminator_single_latent.1} parent=47 // pred_fallthru
          _
        // Predicated region
        $region53: #{discriminator_single_latent.1} parent=47 // pred_check
          %p328 = pneg %p72
        $region54: #{discriminator_single_latent.1} parent=47 // pred_check_branch
          %330 = sbr.rel (%p328) target = $region56
        $region55: #{discriminator_single_latent.1} parent=47 // pred_region
          %331 = dma.done [#allocation7], 256
        $region56: #{discriminator_single_latent.1} parent=47 // pred_fallthru
          _
        // Predicated region
        $region57: #{discriminator_single_latent.1} parent=47 // pred_check
          %p332 = pneg %p93
        $region58: #{discriminator_single_latent.1} parent=47 // pred_check_branch
          %334 = sbr.rel (%p332) target = $region60
        $region59: #{discriminator_single_latent.1} parent=47 // pred_region
          %335 = dma.done [#allocation7], 4096
        $region60: #{discriminator_single_latent.1} parent=47 // pred_fallthru
          _
        // Predicated region
        $region61: #{discriminator_single_latent.1} parent=47 // pred_check
          %p336 = pneg %p135
        $region62: #{discriminator_single_latent.1} parent=47 // pred_check_branch
          %338 = sbr.rel (%p336) target = $region64
        $region63: #{discriminator_single_latent.1} parent=47 // pred_region
          %339 = dma.done [#allocation10], 128
        $region64: #{discriminator_single_latent.1} parent=47 // pred_fallthru
          _
        %s340 = sand.u32 %s38, 1
        %s341 = scalar_lea.sflag [#allocation4], %s340
        %s342 = sand.u32 %s38, 1
        %s343 = smul.addr %s342, 8
        %s344 = scalar_lea.vmem [#allocation3], %s343
        %p345 = pneg %p51
        %p346 = pneg %p48
        %p347 = pneg %p72
        %p348 = pneg %p69
        %p349 = pneg %p93
        %p350 = pneg %p90
        %p351 = pneg %p114
        %p352 = pneg %p111
        %p353 = pneg %p135
        %p354 = pneg %p132
        %p355 = pneg %p156
        %p356 = pneg %p153
        %p357 = pneg %p177
        %p358 = pneg %p174
        %p359 = pneg %p203
        %p360 = pneg %p200
        %p361 = scmp.lt.s32.totalorder %s30, 3
        %s362 = scalar_select %p361, %s30, 3
        %s363 = smul.addr %s362, 8
        %s364 = scalar_lea.vmem %s7, %s363
        %p365 = pneg %p229
        %p366 = pneg %p226
        %s367 = sand.u32 %s216, 1
        %s368 = scalar_lea.sflag [#allocation5], %s367
        %s369 = sand.u32 %s216, 1
        %s370 = smul.addr %s369, 8
        %s371 = scalar_lea.vmem [#allocation11], %s370
        %p372 = scmp.lt.s32.totalorder %s30, 3
        %s373 = scalar_select %p372, %s30, 3
        %s374 = smul.addr %s373, 8
        %s375 = scalar_lea.vmem %s7, %s374
        %v377 = vld [vmem:[%s323] sm:$0xff]
        %v378 = vpack.c.bf16 %v377, %v377
        %v379 = vld [vmem:[#allocation6] sm:$0xf]
        %v380 = vld [vmem:[#allocation6 + $0x4] sm:$0xf]
        %v381 = vld [vmem:[#allocation6 + $0x8] sm:$0xf]
        %v382 = vld [vmem:[#allocation6 + $0xc] sm:$0xf]
        %v387 = vunpack.c.l.b16 %v379
        %v388 = vunpack.c.l.b16 %v380
        %v389 = vunpack.c.l.b16 %v381
        %v390 = vunpack.c.l.b16 %v382
        %v391 = vpack.c.b16 %v388, %v387
        %v392 = vpack.c.b16 %v390, %v389
        %vm395 = vcmask 261120
        %v397 = vsel %vm395, %v378, 0
        %399 = vmatprep.subr.bf16.mxu0 0
        %400 = vmatpush1.bf16.msra.mxu0 %v391
        %401 = vmatprep.subr.bf16.mxu0 0
        %402 = vmatpush1.bf16.msra.mxu0 %v392
        %403 = vmatprep.subr.bf16.mxu0 0
        %404 = vmatpush1.bf16.msra.mxu0 0
        %405 = vmatprep.subr.bf16.mxu0 0
        %406 = vmatpush1.bf16.msra.mxu0 0
        %407 = vmatprep.subr.bf16.mxu0 0
        %408 = vmatpush1.bf16.msra.mxu0 0
        %409 = vmatprep.subr.bf16.mxu0 0
        %410 = vmatpush1.bf16.msra.mxu0 0
        %411 = vmatprep.subr.bf16.mxu0 0
        %412 = vmatpush1.bf16.msra.mxu0 0
        %413 = vmatprep.subr.bf16.mxu0 0
        %414 = vmatpush1.bf16.msra.mxu0 0
        %415 = vmatprep.subr.bf16.mxu0 0
        %416 = vmatpush1.bf16.msra.mxu0 0
        %417 = vmatprep.subr.bf16.mxu0 0
        %418 = vmatpush1.bf16.msra.mxu0 0
        %419 = vmatprep.subr.bf16.mxu0 0
        %420 = vmatpush1.bf16.msra.mxu0 0
        %421 = vmatprep.subr.bf16.mxu0 0
        %422 = vmatpush1.bf16.msra.mxu0 0
        %423 = vmatprep.subr.bf16.mxu0 0
        %424 = vmatpush1.bf16.msra.mxu0 0
        %425 = vmatprep.subr.bf16.mxu0 0
        %426 = vmatpush1.bf16.msra.mxu0 0
        %427 = vmatprep.subr.bf16.mxu0 0
        %428 = vmatpush1.bf16.msra.mxu0 0
        %429 = vmatprep.subr.bf16.mxu0 0
        %430 = vmatpush1.bf16.msra.mxu0 0
        %431 = vmatprep.mubr.bf16.mxu0 0
        %432 = vmatmul.mubr.bf16.gmra.mrb[0].mxu0 %v397
        %v433 = vpop.f32.mrb[0].mxu0
        %v434 = vadd.f32 0.0, %v433
        %v435 = vpop.f32.mrb[0].mxu0
        %v436 = vpop.f32.mrb[0].mxu0
        %v437 = vpop.f32.mrb[0].mxu0
        %438 = vdwg.mxu0
        %v439 = vld [vmem:[%s3] sm:$0x1]
        %v440 = vld [vmem:[#allocation9] sm:$0x1]
        %v441 = vrot.slane %v434, 4
        %v442 = vadd.f32 %v434, %v441
        %v443 = vrot.slane %v442, 2
        %v444 = vadd.f32 %v442, %v443
        %v445 = vrot.slane %v444, 1
        %v446 = vadd.f32 %v444, %v445
        %v447 = vrcp.pop 8.0
        %v448 = vmul.f32 %v446, %v447
        %v449 = vmul.f32 %v434, %v434
        %v450 = vrot.slane %v449, 4
        %v451 = vadd.f32 %v449, %v450
        %v452 = vrot.slane %v451, 2
        %v453 = vadd.f32 %v451, %v452
        %v454 = vrot.slane %v453, 1
        %v455 = vadd.f32 %v453, %v454
        %v456 = vmul.f32 %v455, %v447
        %v457 = vmul.f32 %v448, %v448
        %v458 = vsub.f32 %v456, %v457
        %v459 = vmax.f32 %v458, 0.0
        %v460 = vadd.f32 %v459, 1e-05
        %v461 = vrsqrt.pop %v460
        %v462 = vmul.f32 %v439, %v461
        %v463 = vmul.f32 %v448, %v462
        %v464 = vsub.f32 %v440, %v463
        %v465 = vlaneseq
        %v466 = vshrl.u32 %v465, 7
        %v467 = vsub.s32 0, %v466
        %v468 = vrot.slane %v462, %v467
        %v469 = vmul.f32 %v434, %v468
        %v470 = vlaneseq
        %v471 = vshrl.u32 %v470, 7
        %v472 = vsub.s32 0, %v471
        %v473 = vrot.slane %v464, %v472
        %v474 = vadd.f32 %v469, %v473
        %v475 = vmul.f32 %v474, 0.2
        %v476 = vmax.f32 %v474, %v475
        %v477 = vpack.c.bf16 %v476, %v476
        %v478 = vld [vmem:[#allocation8] sm:$0xf]
        %v479 = vld [vmem:[#allocation8 + $0x4] sm:$0xf]
        %v480 = vld [vmem:[#allocation8 + $0x8] sm:$0xf]
        %v481 = vld [vmem:[#allocation8 + $0xc] sm:$0xf]
        %v482 = vld [vmem:[#allocation8 + $0x10] sm:$0xf]
        %v483 = vld [vmem:[#allocation8 + $0x14] sm:$0xf]
        %v484 = vld [vmem:[#allocation8 + $0x18] sm:$0xf]
        %v485 = vld [vmem:[#allocation8 + $0x1c] sm:$0xf]
        %v486 = vld [vmem:[#allocation8 + $0x20] sm:$0xf]
        %v487 = vld [vmem:[#allocation8 + $0x24] sm:$0xf]
        %v488 = vld [vmem:[#allocation8 + $0x28] sm:$0xf]
        %v489 = vld [vmem:[#allocation8 + $0x2c] sm:$0xf]
        %v490 = vld [vmem:[#allocation8 + $0x30] sm:$0xf]
        %v491 = vld [vmem:[#allocation8 + $0x34] sm:$0xf]
        %v492 = vld [vmem:[#allocation8 + $0x38] sm:$0xf]
        %v493 = vld [vmem:[#allocation8 + $0x3c] sm:$0xf]
        %v510 = vunpack.c.l.b16 %v478
        %v511 = vunpack.c.l.b16 %v479
        %v512 = vunpack.c.l.b16 %v480
        %v513 = vunpack.c.l.b16 %v481
        %v514 = vunpack.c.l.b16 %v482
        %v515 = vunpack.c.l.b16 %v483
        %v516 = vunpack.c.l.b16 %v484
        %v517 = vunpack.c.l.b16 %v485
        %v518 = vunpack.c.l.b16 %v486
        %v519 = vunpack.c.l.b16 %v487
        %v520 = vunpack.c.l.b16 %v488
        %v521 = vunpack.c.l.b16 %v489
        %v522 = vunpack.c.l.b16 %v490
        %v523 = vunpack.c.l.b16 %v491
        %v524 = vunpack.c.l.b16 %v492
        %v525 = vunpack.c.l.b16 %v493
        %v526 = vpack.c.b16 %v511, %v510
        %v527 = vpack.c.b16 %v513, %v512
        %v528 = vpack.c.b16 %v515, %v514
        %v529 = vpack.c.b16 %v517, %v516
        %v530 = vpack.c.b16 %v519, %v518
        %v531 = vpack.c.b16 %v521, %v520
        %v532 = vpack.c.b16 %v523, %v522
        %v533 = vpack.c.b16 %v525, %v524
        %542 = vmatprep.subr.bf16.mxu0 0
        %543 = vmatpush1.bf16.msra.mxu0 %v526
        %544 = vmatprep.subr.bf16.mxu0 0
        %545 = vmatpush1.bf16.msra.mxu0 %v527
        %546 = vmatprep.subr.bf16.mxu0 0
        %547 = vmatpush1.bf16.msra.mxu0 %v528
        %548 = vmatprep.subr.bf16.mxu0 0
        %549 = vmatpush1.bf16.msra.mxu0 %v529
        %550 = vmatprep.subr.bf16.mxu0 0
        %551 = vmatpush1.bf16.msra.mxu0 %v530
        %552 = vmatprep.subr.bf16.mxu0 0
        %553 = vmatpush1.bf16.msra.mxu0 %v531
        %554 = vmatprep.subr.bf16.mxu0 0
        %555 = vmatpush1.bf16.msra.mxu0 %v532
        %556 = vmatprep.subr.bf16.mxu0 0
        %557 = vmatpush1.bf16.msra.mxu0 %v533
        %558 = vmatprep.subr.bf16.mxu0 0
        %559 = vmatpush1.bf16.msra.mxu0 0
        %560 = vmatprep.subr.bf16.mxu0 0
        %561 = vmatpush1.bf16.msra.mxu0 0
        %562 = vmatprep.subr.bf16.mxu0 0
        %563 = vmatpush1.bf16.msra.mxu0 0
        %564 = vmatprep.subr.bf16.mxu0 0
        %565 = vmatpush1.bf16.msra.mxu0 0
        %566 = vmatprep.subr.bf16.mxu0 0
        %567 = vmatpush1.bf16.msra.mxu0 0
        %568 = vmatprep.subr.bf16.mxu0 0
        %569 = vmatpush1.bf16.msra.mxu0 0
        %570 = vmatprep.subr.bf16.mxu0 0
        %571 = vmatpush1.bf16.msra.mxu0 0
        %572 = vmatprep.subr.bf16.mxu0 0
        %573 = vmatpush1.bf16.msra.mxu0 0
        %574 = vmatprep.mubr.bf16.mxu0 0
        %575 = vmatmul.mubr.bf16.gmra.mrb[0].mxu0 %v477
        %v576 = vpop.f32.mrb[0].mxu0
        %v577 = vadd.f32 0.0, %v576
        %v578 = vpop.f32.mrb[0].mxu0
        %v579 = vpop.f32.mrb[0].mxu0
        %v580 = vpop.f32.mrb[0].mxu0
        %581 = vdwg.mxu0
        %v582 = vld [vmem:[%s3 + $0x1] sm:$0x1]
        %v583 = vld [vmem:[#allocation9 + $0x1] sm:$0x1]
        %v584 = vrot.slane %v577, 4
        %v585 = vadd.f32 %v577, %v584
        %v586 = vrot.slane %v585, 2
        %v587 = vadd.f32 %v585, %v586
        %v588 = vrot.slane %v587, 1
        %v589 = vadd.f32 %v587, %v588
        %v590 = vmul.f32 %v589, %v447
        %v591 = vmul.f32 %v577, %v577
        %v592 = vrot.slane %v591, 4
        %v593 = vadd.f32 %v591, %v592
        %v594 = vrot.slane %v593, 2
        %v595 = vadd.f32 %v593, %v594
        %v596 = vrot.slane %v595, 1
        %v597 = vadd.f32 %v595, %v596
        %v598 = vmul.f32 %v597, %v447
        %v599 = vmul.f32 %v590, %v590
        %v600 = vsub.f32 %v598, %v599
        %v601 = vmax.f32 %v600, 0.0
        %v602 = vadd.f32 %v601, 1e-05
        %v603 = vrsqrt.pop %v602
        %v604 = vmul.f32 %v582, %v603
        %v605 = vmul.f32 %v590, %v604
        %v606 = vsub.f32 %v583, %v605
        %v607 = vlaneseq
        %v608 = vshrl.u32 %v607, 7
        %v609 = vsub.s32 0, %v608
        %v610 = vrot.slane %v604, %v609
        %v611 = vmul.f32 %v577, %v610
        %v612 = vlaneseq
        %v613 = vshrl.u32 %v612, 7
        %v614 = vsub.s32 0, %v613
        %v615 = vrot.slane %v606, %v614
        %v616 = vadd.f32 %v611, %v615
        %v617 = vmul.f32 %v616, 0.2
        %v618 = vmax.f32 %v616, %v617
        %v619 = vpack.c.bf16 %v618, %v618
        %s620 = scalar_lea.vmem [#allocation8], 64
        %v621 = vld [vmem:[%s620] sm:$0xf]
        %v622 = vld [vmem:[%s620 + $0x4] sm:$0xf]
        %v623 = vld [vmem:[%s620 + $0x8] sm:$0xf]
        %v624 = vld [vmem:[%s620 + $0xc] sm:$0xf]
        %v625 = vld [vmem:[%s620 + $0x10] sm:$0xf]
        %v626 = vld [vmem:[%s620 + $0x14] sm:$0xf]
        %v627 = vld [vmem:[%s620 + $0x18] sm:$0xf]
        %v628 = vld [vmem:[%s620 + $0x1c] sm:$0xf]
        %v629 = vld [vmem:[%s620 + $0x20] sm:$0xf]
        %v630 = vld [vmem:[%s620 + $0x24] sm:$0xf]
        %v631 = vld [vmem:[%s620 + $0x28] sm:$0xf]
        %v632 = vld [vmem:[%s620 + $0x2c] sm:$0xf]
        %v633 = vld [vmem:[%s620 + $0x30] sm:$0xf]
        %v634 = vld [vmem:[%s620 + $0x34] sm:$0xf]
        %v635 = vld [vmem:[%s620 + $0x38] sm:$0xf]
        %v636 = vld [vmem:[%s620 + $0x3c] sm:$0xf]
        %v653 = vunpack.c.l.b16 %v621
        %v654 = vunpack.c.l.b16 %v622
        %v655 = vunpack.c.l.b16 %v623
        %v656 = vunpack.c.l.b16 %v624
        %v657 = vunpack.c.l.b16 %v625
        %v658 = vunpack.c.l.b16 %v626
        %v659 = vunpack.c.l.b16 %v627
        %v660 = vunpack.c.l.b16 %v628
        %v661 = vunpack.c.l.b16 %v629
        %v662 = vunpack.c.l.b16 %v630
        %v663 = vunpack.c.l.b16 %v631
        %v664 = vunpack.c.l.b16 %v632
        %v665 = vunpack.c.l.b16 %v633
        %v666 = vunpack.c.l.b16 %v634
        %v667 = vunpack.c.l.b16 %v635
        %v668 = vunpack.c.l.b16 %v636
        %v669 = vpack.c.b16 %v654, %v653
        %v670 = vpack.c.b16 %v656, %v655
        %v671 = vpack.c.b16 %v658, %v657
        %v672 = vpack.c.b16 %v660, %v659
        %v673 = vpack.c.b16 %v662, %v661
        %v674 = vpack.c.b16 %v664, %v663
        %v675 = vpack.c.b16 %v666, %v665
        %v676 = vpack.c.b16 %v668, %v667
        %685 = vmatprep.subr.bf16.mxu0 0
        %686 = vmatpush1.bf16.msra.mxu0 %v669
        %687 = vmatprep.subr.bf16.mxu0 0
        %688 = vmatpush1.bf16.msra.mxu0 %v670
        %689 = vmatprep.subr.bf16.mxu0 0
        %690 = vmatpush1.bf16.msra.mxu0 %v671
        %691 = vmatprep.subr.bf16.mxu0 0
        %692 = vmatpush1.bf16.msra.mxu0 %v672
        %693 = vmatprep.subr.bf16.mxu0 0
        %694 = vmatpush1.bf16.msra.mxu0 %v673
        %695 = vmatprep.subr.bf16.mxu0 0
        %696 = vmatpush1.bf16.msra.mxu0 %v674
        %697 = vmatprep.subr.bf16.mxu0 0
        %698 = vmatpush1.bf16.msra.mxu0 %v675
        %699 = vmatprep.subr.bf16.mxu0 0
        %700 = vmatpush1.bf16.msra.mxu0 %v676
        %701 = vmatprep.subr.bf16.mxu0 0
        %702 = vmatpush1.bf16.msra.mxu0 0
        %703 = vmatprep.subr.bf16.mxu0 0
        %704 = vmatpush1.bf16.msra.mxu0 0
        %705 = vmatprep.subr.bf16.mxu0 0
        %706 = vmatpush1.bf16.msra.mxu0 0
        %707 = vmatprep.subr.bf16.mxu0 0
        %708 = vmatpush1.bf16.msra.mxu0 0
        %709 = vmatprep.subr.bf16.mxu0 0
        %710 = vmatpush1.bf16.msra.mxu0 0
        %711 = vmatprep.subr.bf16.mxu0 0
        %712 = vmatpush1.bf16.msra.mxu0 0
        %713 = vmatprep.subr.bf16.mxu0 0
        %714 = vmatpush1.bf16.msra.mxu0 0
        %715 = vmatprep.subr.bf16.mxu0 0
        %716 = vmatpush1.bf16.msra.mxu0 0
        %717 = vmatprep.mubr.bf16.mxu0 0
        %718 = vmatmul.mubr.bf16.gmra.mrb[0].mxu0 %v619
        %v719 = vpop.f32.mrb[0].mxu0
        %v720 = vadd.f32 0.0, %v719
        %v721 = vpop.f32.mrb[0].mxu0
        %v722 = vpop.f32.mrb[0].mxu0
        %v723 = vpop.f32.mrb[0].mxu0
        %724 = vdwg.mxu0
        %v725 = vld [vmem:[%s3 + $0x2] sm:$0x1]
        %v726 = vld [vmem:[#allocation9 + $0x2] sm:$0x1]
        %v727 = vrot.slane %v720, 4
        %v728 = vadd.f32 %v720, %v727
        %v729 = vrot.slane %v728, 2
        %v730 = vadd.f32 %v728, %v729
        %v731 = vrot.slane %v730, 1
        %v732 = vadd.f32 %v730, %v731
        %v733 = vmul.f32 %v732, %v447
        %v734 = vmul.f32 %v720, %v720
        %v735 = vrot.slane %v734, 4
        %v736 = vadd.f32 %v734, %v735
        %v737 = vrot.slane %v736, 2
        %v738 = vadd.f32 %v736, %v737
        %v739 = vrot.slane %v738, 1
        %v740 = vadd.f32 %v738, %v739
        %v741 = vmul.f32 %v740, %v447
        %v742 = vmul.f32 %v733, %v733
        %v743 = vsub.f32 %v741, %v742
        %v744 = vmax.f32 %v743, 0.0
        %v745 = vadd.f32 %v744, 1e-05
        %v746 = vrsqrt.pop %v745
        %v747 = vmul.f32 %v725, %v746
        %v748 = vmul.f32 %v733, %v747
        %v749 = vsub.f32 %v726, %v748
        %v750 = vlaneseq
        %v751 = vshrl.u32 %v750, 7
        %v752 = vsub.s32 0, %v751
        %v753 = vrot.slane %v747, %v752
        %v754 = vmul.f32 %v720, %v753
        %v755 = vlaneseq
        %v756 = vshrl.u32 %v755, 7
        %v757 = vsub.s32 0, %v756
        %v758 = vrot.slane %v749, %v757
        %v759 = vadd.f32 %v754, %v758
        %v760 = vmul.f32 %v759, 0.2
        %v761 = vmax.f32 %v759, %v760
        %v762 = vpack.c.bf16 %v761, %v761
        %s763 = scalar_lea.vmem [#allocation8], 128
        %v764 = vld [vmem:[%s763] sm:$0xf]
        %v765 = vld [vmem:[%s763 + $0x4] sm:$0xf]
        %v766 = vld [vmem:[%s763 + $0x8] sm:$0xf]
        %v767 = vld [vmem:[%s763 + $0xc] sm:$0xf]
        %v768 = vld [vmem:[%s763 + $0x10] sm:$0xf]
        %v769 = vld [vmem:[%s763 + $0x14] sm:$0xf]
        %v770 = vld [vmem:[%s763 + $0x18] sm:$0xf]
        %v771 = vld [vmem:[%s763 + $0x1c] sm:$0xf]
        %v772 = vld [vmem:[%s763 + $0x20] sm:$0xf]
        %v773 = vld [vmem:[%s763 + $0x24] sm:$0xf]
        %v774 = vld [vmem:[%s763 + $0x28] sm:$0xf]
        %v775 = vld [vmem:[%s763 + $0x2c] sm:$0xf]
        %v776 = vld [vmem:[%s763 + $0x30] sm:$0xf]
        %v777 = vld [vmem:[%s763 + $0x34] sm:$0xf]
        %v778 = vld [vmem:[%s763 + $0x38] sm:$0xf]
        %v779 = vld [vmem:[%s763 + $0x3c] sm:$0xf]
        %v796 = vunpack.c.l.b16 %v764
        %v797 = vunpack.c.l.b16 %v765
        %v798 = vunpack.c.l.b16 %v766
        %v799 = vunpack.c.l.b16 %v767
        %v800 = vunpack.c.l.b16 %v768
        %v801 = vunpack.c.l.b16 %v769
        %v802 = vunpack.c.l.b16 %v770
        %v803 = vunpack.c.l.b16 %v771
        %v804 = vunpack.c.l.b16 %v772
        %v805 = vunpack.c.l.b16 %v773
        %v806 = vunpack.c.l.b16 %v774
        %v807 = vunpack.c.l.b16 %v775
        %v808 = vunpack.c.l.b16 %v776
        %v809 = vunpack.c.l.b16 %v777
        %v810 = vunpack.c.l.b16 %v778
        %v811 = vunpack.c.l.b16 %v779
        %v812 = vpack.c.b16 %v797, %v796
        %v813 = vpack.c.b16 %v799, %v798
        %v814 = vpack.c.b16 %v801, %v800
        %v815 = vpack.c.b16 %v803, %v802
        %v816 = vpack.c.b16 %v805, %v804
        %v817 = vpack.c.b16 %v807, %v806
        %v818 = vpack.c.b16 %v809, %v808
        %v819 = vpack.c.b16 %v811, %v810
        %828 = vmatprep.subr.bf16.mxu0 0
        %829 = vmatpush1.bf16.msra.mxu0 %v812
        %830 = vmatprep.subr.bf16.mxu0 0
        %831 = vmatpush1.bf16.msra.mxu0 %v813
        %832 = vmatprep.subr.bf16.mxu0 0
        %833 = vmatpush1.bf16.msra.mxu0 %v814
        %834 = vmatprep.subr.bf16.mxu0 0
        %835 = vmatpush1.bf16.msra.mxu0 %v815
        %836 = vmatprep.subr.bf16.mxu0 0
        %837 = vmatpush1.bf16.msra.mxu0 %v816
        %838 = vmatprep.subr.bf16.mxu0 0
        %839 = vmatpush1.bf16.msra.mxu0 %v817
        %840 = vmatprep.subr.bf16.mxu0 0
        %841 = vmatpush1.bf16.msra.mxu0 %v818
        %842 = vmatprep.subr.bf16.mxu0 0
        %843 = vmatpush1.bf16.msra.mxu0 %v819
        %844 = vmatprep.subr.bf16.mxu0 0
        %845 = vmatpush1.bf16.msra.mxu0 0
        %846 = vmatprep.subr.bf16.mxu0 0
        %847 = vmatpush1.bf16.msra.mxu0 0
        %848 = vmatprep.subr.bf16.mxu0 0
        %849 = vmatpush1.bf16.msra.mxu0 0
        %850 = vmatprep.subr.bf16.mxu0 0
        %851 = vmatpush1.bf16.msra.mxu0 0
        %852 = vmatprep.subr.bf16.mxu0 0
        %853 = vmatpush1.bf16.msra.mxu0 0
        %854 = vmatprep.subr.bf16.mxu0 0
        %855 = vmatpush1.bf16.msra.mxu0 0
        %856 = vmatprep.subr.bf16.mxu0 0
        %857 = vmatpush1.bf16.msra.mxu0 0
        %858 = vmatprep.subr.bf16.mxu0 0
        %859 = vmatpush1.bf16.msra.mxu0 0
        %860 = vmatprep.mubr.bf16.mxu0 0
        %861 = vmatmul.mubr.bf16.gmra.mrb[0].mxu0 %v762
        %v862 = vpop.f32.mrb[0].mxu0
        %v863 = vadd.f32 0.0, %v862
        %v864 = vpop.f32.mrb[0].mxu0
        %v865 = vpop.f32.mrb[0].mxu0
        %v866 = vpop.f32.mrb[0].mxu0
        %867 = vdwg.mxu0
        %v868 = vld [vmem:[%s3 + $0x3] sm:$0x1]
        %v869 = vld [vmem:[#allocation9 + $0x3] sm:$0x1]
        %v870 = vrot.slane %v863, 4
        %v871 = vadd.f32 %v863, %v870
        %v872 = vrot.slane %v871, 2
        %v873 = vadd.f32 %v871, %v872
        %v874 = vrot.slane %v873, 1
        %v875 = vadd.f32 %v873, %v874
        %v876 = vmul.f32 %v875, %v447
        %v877 = vmul.f32 %v863, %v863
        %v878 = vrot.slane %v877, 4
        %v879 = vadd.f32 %v877, %v878
        %v880 = vrot.slane %v879, 2
        %v881 = vadd.f32 %v879, %v880
        %v882 = vrot.slane %v881, 1
        %v883 = vadd.f32 %v881, %v882
        %v884 = vmul.f32 %v883, %v447
        %v885 = vmul.f32 %v876, %v876
        %v886 = vsub.f32 %v884, %v885
        %v887 = vmax.f32 %v886, 0.0
        %v888 = vadd.f32 %v887, 1e-05
        %v889 = vrsqrt.pop %v888
        %v890 = vmul.f32 %v868, %v889
        %v891 = vmul.f32 %v876, %v890
        %v892 = vsub.f32 %v869, %v891
        %v893 = vlaneseq
        %v894 = vshrl.u32 %v893, 7
        %v895 = vsub.s32 0, %v894
        %v896 = vrot.slane %v890, %v895
        %v897 = vmul.f32 %v863, %v896
        %v898 = vlaneseq
        %v899 = vshrl.u32 %v898, 7
        %v900 = vsub.s32 0, %v899
        %v901 = vrot.slane %v892, %v900
        %v902 = vadd.f32 %v897, %v901
        %v903 = vmul.f32 %v902, 0.2
        %v904 = vmax.f32 %v902, %v903
        %905 = vst [vmem:[%s371] sm:$0xff] %v904
        %v906 = vpack.c.bf16 %v904, %v904
        %s907 = scalar_lea.vmem [#allocation8], 192
        %v908 = vld [vmem:[%s907] sm:$0xf]
        %v909 = vld [vmem:[%s907 + $0x4] sm:$0xf]
        %v910 = vld [vmem:[%s907 + $0x8] sm:$0xf]
        %v911 = vld [vmem:[%s907 + $0xc] sm:$0xf]
        %v912 = vld [vmem:[%s907 + $0x10] sm:$0xf]
        %v913 = vld [vmem:[%s907 + $0x14] sm:$0xf]
        %v914 = vld [vmem:[%s907 + $0x18] sm:$0xf]
        %v915 = vld [vmem:[%s907 + $0x1c] sm:$0xf]
        %v916 = vld [vmem:[%s907 + $0x20] sm:$0xf]
        %v917 = vld [vmem:[%s907 + $0x24] sm:$0xf]
        %v918 = vld [vmem:[%s907 + $0x28] sm:$0xf]
        %v919 = vld [vmem:[%s907 + $0x2c] sm:$0xf]
        %v920 = vld [vmem:[%s907 + $0x30] sm:$0xf]
        %v921 = vld [vmem:[%s907 + $0x34] sm:$0xf]
        %v922 = vld [vmem:[%s907 + $0x38] sm:$0xf]
        %v923 = vld [vmem:[%s907 + $0x3c] sm:$0xf]
        %v940 = vunpack.c.l.b16 %v908
        %v941 = vunpack.c.l.b16 %v909
        %v942 = vunpack.c.l.b16 %v910
        %v943 = vunpack.c.l.b16 %v911
        %v944 = vunpack.c.l.b16 %v912
        %v945 = vunpack.c.l.b16 %v913
        %v946 = vunpack.c.l.b16 %v914
        %v947 = vunpack.c.l.b16 %v915
        %v948 = vunpack.c.l.b16 %v916
        %v949 = vunpack.c.l.b16 %v917
        %v950 = vunpack.c.l.b16 %v918
        %v951 = vunpack.c.l.b16 %v919
        %v952 = vunpack.c.l.b16 %v920
        %v953 = vunpack.c.l.b16 %v921
        %v954 = vunpack.c.l.b16 %v922
        %v955 = vunpack.c.l.b16 %v923
        %v956 = vpack.c.b16 %v941, %v940
        %v957 = vpack.c.b16 %v943, %v942
        %v958 = vpack.c.b16 %v945, %v944
        %v959 = vpack.c.b16 %v947, %v946
        %v960 = vpack.c.b16 %v949, %v948
        %v961 = vpack.c.b16 %v951, %v950
        %v962 = vpack.c.b16 %v953, %v952
        %v963 = vpack.c.b16 %v955, %v954
        %972 = vmatprep.subr.bf16.mxu0 0
        %973 = vmatpush1.bf16.msra.mxu0 %v956
        %974 = vmatprep.subr.bf16.mxu0 0
        %975 = vmatpush1.bf16.msra.mxu0 %v957
        %976 = vmatprep.subr.bf16.mxu0 0
        %977 = vmatpush1.bf16.msra.mxu0 %v958
        %978 = vmatprep.subr.bf16.mxu0 0
        %979 = vmatpush1.bf16.msra.mxu0 %v959
        %980 = vmatprep.subr.bf16.mxu0 0
        %981 = vmatpush1.bf16.msra.mxu0 %v960
        %982 = vmatprep.subr.bf16.mxu0 0
        %983 = vmatpush1.bf16.msra.mxu0 %v961
        %984 = vmatprep.subr.bf16.mxu0 0
        %985 = vmatpush1.bf16.msra.mxu0 %v962
        %986 = vmatprep.subr.bf16.mxu0 0
        %987 = vmatpush1.bf16.msra.mxu0 %v963
        %988 = vmatprep.subr.bf16.mxu0 0
        %989 = vmatpush1.bf16.msra.mxu0 0
        %990 = vmatprep.subr.bf16.mxu0 0
        %991 = vmatpush1.bf16.msra.mxu0 0
        %992 = vmatprep.subr.bf16.mxu0 0
        %993 = vmatpush1.bf16.msra.mxu0 0
        %994 = vmatprep.subr.bf16.mxu0 0
        %995 = vmatpush1.bf16.msra.mxu0 0
        %996 = vmatprep.subr.bf16.mxu0 0
        %997 = vmatpush1.bf16.msra.mxu0 0
        %998 = vmatprep.subr.bf16.mxu0 0
        %999 = vmatpush1.bf16.msra.mxu0 0
        %1000 = vmatprep.subr.bf16.mxu0 0
        %1001 = vmatpush1.bf16.msra.mxu0 0
        %1002 = vmatprep.subr.bf16.mxu0 0
        %1003 = vmatpush1.bf16.msra.mxu0 0
        %1004 = vmatprep.mubr.bf16.mxu0 0
        %1005 = vmatmul.mubr.bf16.gmra.mrb[0].mxu0 %v906
        %v1006 = vpop.f32.mrb[0].mxu0
        %v1007 = vadd.f32 0.0, %v1006
        %v1008 = vpop.f32.mrb[0].mxu0
        %v1009 = vpop.f32.mrb[0].mxu0
        %v1010 = vpop.f32.mrb[0].mxu0
        %1011 = vdwg.mxu0
        %v1012 = vld [vmem:[%s3 + $0x4] sm:$0x1]
        %v1013 = vld [vmem:[#allocation9 + $0x4] sm:$0x1]
        %v1014 = vrot.slane %v1007, 4
        %v1015 = vadd.f32 %v1007, %v1014
        %v1016 = vrot.slane %v1015, 2
        %v1017 = vadd.f32 %v1015, %v1016
        %v1018 = vrot.slane %v1017, 1
        %v1019 = vadd.f32 %v1017, %v1018
        %v1020 = vmul.f32 %v1019, %v447
        %v1021 = vmul.f32 %v1007, %v1007
        %v1022 = vrot.slane %v1021, 4
        %v1023 = vadd.f32 %v1021, %v1022
        %v1024 = vrot.slane %v1023, 2
        %v1025 = vadd.f32 %v1023, %v1024
        %v1026 = vrot.slane %v1025, 1
        %v1027 = vadd.f32 %v1025, %v1026
        %v1028 = vmul.f32 %v1027, %v447
        %v1029 = vmul.f32 %v1020, %v1020
        %v1030 = vsub.f32 %v1028, %v1029
        %v1031 = vmax.f32 %v1030, 0.0
        %v1032 = vadd.f32 %v1031, 1e-05
        %v1033 = vrsqrt.pop %v1032
        %v1034 = vmul.f32 %v1012, %v1033
        %v1035 = vmul.f32 %v1020, %v1034
        %v1036 = vsub.f32 %v1013, %v1035
        %v1037 = vlaneseq
        %v1038 = vshrl.u32 %v1037, 7
        %v1039 = vsub.s32 0, %v1038
        %v1040 = vrot.slane %v1034, %v1039
        %v1041 = vmul.f32 %v1007, %v1040
        %v1042 = vlaneseq
        %v1043 = vshrl.u32 %v1042, 7
        %v1044 = vsub.s32 0, %v1043
        %v1045 = vrot.slane %v1036, %v1044
        %v1046 = vadd.f32 %v1041, %v1045
        %v1047 = vmul.f32 %v1046, 0.2
        %v1048 = vmax.f32 %v1046, %v1047
        %v1049 = vld [vmem:[%s5] sm:$0x1]
        %v1051 = vlaneseq
        %v1052 = vshrl.u32 %v1051, 7
        %v1053 = vsub.s32 0, %v1052
        %v1054 = vrot.slane %v1049, %v1053
        %v1056 = vmul.f32 %v1048, %v1054
        %1057 = vadd.xlane.f32.xlu0 %v1056
        %v1058 = vpop.xlane.xlu0 %1057
        %v1059 = vld [vmem:[#allocation2] sm:$0x1]
        %v1061 = vlaneseq
        %v1062 = vshrl.u32 %v1061, 7
        %v1063 = vsub.s32 0, %v1062
        %v1064 = vrot.slane %v1059, %v1063
        %v1066 = vadd.f32 %v1058, %v1064
        %1068 = vset.pattern.permute.xlu0 0
        %1069 = vperm.xlu0 %1068, %v1066
        %v1070 = vpop.permute.xlu0 %1069
        %1072 = vst [vmem:[%s375] sm:$0xff] %v1070
        %p1073 = scmp.lt.s32.totalorder %s30, 3
        %s1074 = scalar_select %p1073, %s30, 3
        %s1075 = smul.addr %s1074, 8
        %s1076 = scalar_lea.vmem %s7, %s1075
        %s1077 = sand.u32 %s216, 1
        %s1078 = scalar_lea.sflag [#allocation5], %s1077
        %s1079 = sand.u32 %s216, 1
        %s1080 = smul.addr %s1079, 8
        %s1081 = scalar_lea.vmem [#allocation11], %s1080
        // Predicated region
        $region65: #{discriminator_single_latent.1} parent=47 // pred_check
          %p1082 = pneg %p200
        $region66: #{discriminator_single_latent.1} parent=47 // pred_check_branch
          %1084 = sbr.rel (%p1082) target = $region68
        $region67: #{discriminator_single_latent.1} parent=47 // pred_region
          _
        $region68: #{discriminator_single_latent.1} parent=47 // pred_fallthru
          _
        // Predicated region
        $region69: #{discriminator_single_latent.1} parent=47 // pred_check
          %p1085 = pneg %p226
        $region70: #{discriminator_single_latent.1} parent=47 // pred_check_branch
          %1087 = sbr.rel (%p1085) target = $region72
        $region71: #{discriminator_single_latent.1} parent=47 // pred_region
          %s1089 = ssub.s32 128, 128
          %1090 = vsyncadd %s1078, %s1089
          %s1091 = smul.addr %s30, 128
          %s1092 = scalar_lea.hbm %s8, %s1091
          %s1094 = sshll.u32 %s1081, 4
          %s1095 = int_to_ptr.vmem [resolvable:$true] %s1094
          %1097 = dma.vmem_to_hbm [thread:$0]  %s1095, 128, %s1092, %s1078
        $region72: #{discriminator_single_latent.1} parent=47 // pred_fallthru
          _
      $region48: #{discriminator_single_latent.1} parent=5 // pred_fallthru
        _
      %p1098 = scmp.le.s32.totalorder 2, %s25
      // Predicated region
      $region73: #{discriminator_single_latent.1} parent=5 // pred_check
        %p1099 = pneg %p1098
      $region74: #{discriminator_single_latent.1} parent=5 // pred_check_branch
        %1101 = sbr.rel (%p1099) target = $region76
      $region75: #{discriminator_single_latent.1} parent=5 // pred_region
        %s1102 = ssub.s32 %s25, 2
        // Predicated region
        $region77: #{discriminator_single_latent.1} parent=75 // pred_check
          %p1103 = pneg %p206
        $region78: #{discriminator_single_latent.1} parent=75 // pred_check_branch
          %1105 = sbr.rel (%p1103) target = $region80
        $region79: #{discriminator_single_latent.1} parent=75 // pred_region
          %p1106 = scmp.lt.s32.totalorder %s31, 3
          %s1107 = scalar_select %p1106, %s31, 3
          %s1108 = smul.addr %s1107, 8
          %s1109 = scalar_lea.vmem %s7, %s1108
        $region80: #{discriminator_single_latent.1} parent=75 // pred_fallthru
          _
        // Predicated region
        $region81: #{discriminator_single_latent.1} parent=75 // pred_check
          %p1110 = pneg %p232
        $region82: #{discriminator_single_latent.1} parent=75 // pred_check_branch
          %1112 = sbr.rel (%p1110) target = $region84
        $region83: #{discriminator_single_latent.1} parent=75 // pred_region
          %s1113 = sand.u32 %s217, 1
          %s1114 = scalar_lea.sflag [#allocation5], %s1113
          %s1115 = sand.u32 %s217, 1
          %s1116 = smul.addr %s1115, 8
          %s1117 = scalar_lea.vmem [#allocation11], %s1116
          %1118 = dma.done %s1114, 128
        $region84: #{discriminator_single_latent.1} parent=75 // pred_fallthru
          _
      $region76: #{discriminator_single_latent.1} parent=5 // pred_fallthru
        _
    $region6: #{discriminator_single_latent.1} parent=1 // loop_footer
      %s29 = sadd.s32 1, %s25
    $region7: #{discriminator_single_latent.1} parent=1 // loop_footer_branch
      %24 = sbr.rel target = $region3
    $region8: #{discriminator_single_latent.1} parent=1 // loop_exit
      _
    %1119 = vsyncpa [#allocation4], 1
    %s1120 = scalar_lea.sflag [#allocation4], 1
    %1121 = vsyncpa %s1120, 1
    %1122 = vsyncpa [#allocation7], 1
    %1123 = vsyncpa [#allocation10], 1
    %1124 = vsyncpa [#allocation5], 1
    %s1125 = scalar_lea.sflag [#allocation5], 1
    %1126 = vsyncpa %s1125, 1

</llo_original>
